<compile_context>
chip_gen: v7x
topology: tpu7x:2x2x1
jax: 0.10.0
libtpu: 0.0.40
codegen_flags: <defaults>
</compile_context>

<pallas_src>
import jax
import jax.numpy as jnp
from jax.experimental import pallas as pl
from jax.experimental.pallas import tpu as pltpu


# ----------------------------- Pallas kernel ------------------------------ #
def _make_up_doubleconv_kernel(H, W, C2, C1, Cout):
    """Builds the fused upsample + concat + DoubleConv kernel (static shapes)."""
    Cin = C2 + C1
    HW = H * W

    def kernel(x2_ref, x1_ref, pt_ref, mask_ref,
               w1_ref, s1_ref, b1_ref, w2_ref, s2_ref, b2_ref,
               o_ref, xbuf):
        # x2_ref  : (1, C2, HW)      f32  skip connection (channel-major)
        # x1_ref  : (1, C1, H1*W1)   f32  deep features (small, pre-upsample)
        # pt_ref  : (H1*W1, HW)      f32  Kronecker bilinear-interp matrix^T
        # mask_ref: (9, HW)          f32  per-tap boundary masks (0/1)
        # w*_ref  : (9, Cout, Cin/Cout) bf16 per-tap conv weights (Cout, Cin)
        # s*/b*   : (Cout, 1)        f32  folded BN scale / bias (+conv bias)
        # o_ref   : (1, Cout, HW)    f32  lane-dense, NCHW-compatible
        # xbuf    : (Cin, HW)        f32  VMEM scratch: concat([x2, x1_up])

        # --- fused bilinear upsample: ONE matmul with the interp matrix ----
        x1_up = jnp.dot(x1_ref[0], pt_ref[...],
                        preferred_element_type=jnp.float32)          # (C1, HW)

        # --- channel concat([x2, x1_up]) in VMEM (sublane stack, no halo,
        #     nothing to zero; every row is rewritten each grid step) -------
        xbuf[0:C2, :] = x2_ref[0]
        xbuf[C2:Cin, :] = x1_up
        x = xbuf[...]                                                 # (Cin, HW)

        masks = mask_ref[...]                                         # (9, HW)
        w1 = w1_ref[...]                                              # (9, Cout, Cin)
        w2 = w2_ref[...]                                              # (9, Cout, Cout)

        def conv3x3(inp, w_taps):
            # 3x3 "same" conv as 9 accumulated shifted-window matmuls.
            # inp: (C, HW) f32 lane-dense; shift = XLU lane rotate; the zero
            # padding at the image border is a precomputed 0/1 mask multiply.
            acc = jnp.zeros((Cout, HW), jnp.float32)
            for dy in range(3):
                for dx in range(3):
                    t = dy * 3 + dx
                    off = (dy - 1) * W + (dx - 1)   # source = pixel p + off
                    if off == 0:
                        src = inp
                    else:
                        # out[:, p] = inp[:, p + off]  (roll matches jnp.roll)
                        src = pltpu.roll(inp, shift=(-off) % HW, axis=1)
                        src = src * masks[t:t + 1, :]
                    acc = acc + jnp.dot(w_taps[t], src.astype(jnp.bfloat16),
                                        preferred_element_type=jnp.float32)
            return acc

        # conv1 -> folded BN affine -> ReLU (all f32 on the VPU)
        y1 = jnp.maximum(conv3x3(x, w1) * s1_ref[...] + b1_ref[...], 0.0)
        # conv2 on the VMEM-resident intermediate -> BN -> ReLU
        y2 = jnp.maximum(conv3x3(y1, w2) * s2_ref[...] + b2_ref[...], 0.0)

        o_ref[0] = y2    # lane-dense (Cout, HW) store

    return kernel


def up_double_conv(x2_flat, x1_flat, pt, masks,
                   w1_taps, s1, b1, w2_taps, s2, b2, *, H, W):
    """Fused bilinear-upsample + concat + (conv3x3->BN->ReLU)*2.

    x2_flat: (N, C2, H*W) f32;  x1_flat: (N, C1, H1*W1) f32.
    Returns (N, Cout, H*W) f32 (NCHW-compatible after a free reshape).
    """
    N, C2, HW = x2_flat.shape
    C1, H1W1 = x1_flat.shape[1], x1_flat.shape[2]
    Cin = C2 + C1
    Cout = w1_taps.shape[1]
    assert HW == H * W

    kernel = _make_up_doubleconv_kernel(H, W, C2, C1, Cout)

    return pl.pallas_call(
        kernel,
        out_shape=jax.ShapeDtypeStruct((N, Cout, HW), jnp.float32),
        grid=(N,),
        in_specs=[
            pl.BlockSpec((1, C2, HW), lambda n: (n, 0, 0)),
            pl.BlockSpec((1, C1, H1W1), lambda n: (n, 0, 0)),
            pl.BlockSpec((H1W1, HW), lambda n: (0, 0)),
            pl.BlockSpec((9, HW), lambda n: (0, 0)),
            pl.BlockSpec((9, Cout, Cin), lambda n: (0, 0, 0)),
            pl.BlockSpec((Cout, 1), lambda n: (0, 0)),
            pl.BlockSpec((Cout, 1), lambda n: (0, 0)),
            pl.BlockSpec((9, Cout, Cout), lambda n: (0, 0, 0)),
            pl.BlockSpec((Cout, 1), lambda n: (0, 0)),
            pl.BlockSpec((Cout, 1), lambda n: (0, 0)),
        ],
        out_specs=pl.BlockSpec((1, Cout, HW), lambda n: (n, 0, 0)),
        scratch_shapes=[pltpu.VMEM((Cin, HW), jnp.float32)],
        compiler_params=pltpu.CompilerParams(
            dimension_semantics=("parallel",),
        ),
    )(x2_flat, x1_flat, pt, masks, w1_taps, s1, b1, w2_taps, s2, b2)


# ------------------------------- JAX glue --------------------------------- #
def _interp_matrix(out_size, in_size):
    """Row-stochastic bilinear-interp matrix (align_corners=True)."""
    if in_size == 1 or out_size == 1:
        src = jnp.zeros((out_size,), jnp.float32)
    else:
        src = jnp.arange(out_size, dtype=jnp.float32) * (in_size - 1) / (out_size - 1)
    i0 = jnp.clip(jnp.floor(src).astype(jnp.int32), 0, in_size - 1)
    i1 = jnp.clip(i0 + 1, 0, in_size - 1)
    frac = src - i0.astype(jnp.float32)
    rows = jnp.arange(out_size)
    m = jnp.zeros((out_size, in_size), jnp.float32)
    m = m.at[rows, i0].add(1.0 - frac)
    m = m.at[rows, i1].add(frac)
    return m


def _tap_masks(H, W):
    """(9, H*W) 0/1 masks: tap (dy,dx) is valid where the shifted source pixel
    is inside the image (replaces the 1-pixel zero halo)."""
    hh = jnp.repeat(jnp.arange(H), W)
    ww = jnp.tile(jnp.arange(W), H)
    rows = []
    for dy in range(3):
        for dx in range(3):
            oy, ox = dy - 1, dx - 1
            ok = ((hh + oy >= 0) & (hh + oy < H) &
                  (ww + ox >= 0) & (ww + ox < W))
            rows.append(ok.astype(jnp.float32))
    return jnp.stack(rows, axis=0)


def _fold_bn(conv_bias, gamma, beta, mean, var, eps=1e-5):
    scale = gamma / jnp.sqrt(var + eps)
    bias = scale * (conv_bias - mean) + beta
    return scale, bias


def init_up_params(key, in_channels, out_channels):
    ks = jax.random.split(key, 8)
    p = {}
    # conv1: in_channels -> out_channels, weights stored HWIO (3,3,Cin,Cout)
    p["w1"] = 0.1 * jax.random.normal(ks[0], (3, 3, in_channels, out_channels), jnp.float32)
    p["b1"] = 0.05 * jax.random.normal(ks[1], (out_channels,), jnp.float32)
    p["g1"] = 1.0 + 0.1 * jax.random.normal(ks[2], (out_channels,), jnp.float32)
    p["be1"] = 0.05 * jax.random.normal(ks[3], (out_channels,), jnp.float32)
    p["m1"] = jnp.zeros((out_channels,), jnp.float32)
    p["v1"] = jnp.ones((out_channels,), jnp.float32)
    # conv2: out_channels -> out_channels
    p["w2"] = 0.1 * jax.random.normal(ks[4], (3, 3, out_channels, out_channels), jnp.float32)
    p["b2"] = 0.05 * jax.random.normal(ks[5], (out_channels,), jnp.float32)
    p["g2"] = 1.0 + 0.1 * jax.random.normal(ks[6], (out_channels,), jnp.float32)
    p["be2"] = 0.05 * jax.random.normal(ks[7], (out_channels,), jnp.float32)
    p["m2"] = jnp.zeros((out_channels,), jnp.float32)
    p["v2"] = jnp.ones((out_channels,), jnp.float32)
    return p


def up_forward(params, x1_nchw, x2_nchw):
    """Mirrors Up.forward(x1, x2) with bilinear=True.  Inputs/outputs NCHW."""
    N, C1, H1, W1 = x1_nchw.shape
    _, C2, H, W = x2_nchw.shape
    Cout = params["w1"].shape[-1]
    Cin = C2 + C1

    # F.interpolate(..., mode='bilinear', align_corners=True) as a single
    # Kronecker matrix; applied INSIDE the kernel (x1_up never hits HBM).
    A = _interp_matrix(H, H1)                      # (H, H1)
    B = _interp_matrix(W, W1)                      # (W, W1)
    pt = jnp.einsum("ph,qw->hwpq", A, B).reshape(H1 * W1, H * W)

    masks = _tap_masks(H, W)

    s1, b1 = _fold_bn(params["b1"], params["g1"], params["be1"], params["m1"], params["v1"])
    s2, b2 = _fold_bn(params["b2"], params["g2"], params["be2"], params["m2"], params["v2"])

    # HWIO (3,3,Ci,Co) -> per-tap (9, Co, Ci) matrices for the shifted-window matmuls.
    w1_taps = jnp.transpose(params["w1"], (0, 1, 3, 2)).reshape(9, Cout, Cin).astype(jnp.bfloat16)
    w2_taps = jnp.transpose(params["w2"], (0, 1, 3, 2)).reshape(9, Cout, Cout).astype(jnp.bfloat16)

    # NCHW -> (N, C, H*W) is a free contiguous reshape (no transpose anywhere).
    y = up_double_conv(
        x2_nchw.reshape(N, C2, H * W),
        x1_nchw.reshape(N, C1, H1 * W1),
        pt, masks,
        w1_taps, s1.reshape(Cout, 1), b1.reshape(Cout, 1),
        w2_taps, s2.reshape(Cout, 1), b2.reshape(Cout, 1),
        H=H, W=W)

    return y.reshape(N, Cout, H, W)


def _ref_forward(params, x1_nchw, x2_nchw):
    """Pure-JAX f32 reference for correctness checking."""
    x1 = jnp.transpose(x1_nchw, (0, 2, 3, 1))
    x2 = jnp.transpose(x2_nchw, (0, 2, 3, 1))
    A = _interp_matrix(x2.shape[1], x1.shape[1])
    B = _interp_matrix(x2.shape[2], x1.shape[2])
    x1_up = jnp.einsum("ph,nhwc,qw->npqc", A, x1, B)
    x = jnp.concatenate([x2, x1_up], axis=-1)
    s1, b1 = _fold_bn(params["b1"], params["g1"], params["be1"], params["m1"], params["v1"])
    s2, b2 = _fold_bn(params["b2"], params["g2"], params["be2"], params["m2"], params["v2"])
    dn = ("NHWC", "HWIO", "NHWC")
    y = jax.lax.conv_general_dilated(x, params["w1"], (1, 1), "SAME", dimension_numbers=dn)
    y = jnp.maximum(y * s1 + b1, 0.0)
    y = jax.lax.conv_general_dilated(y, params["w2"], (1, 1), "SAME", dimension_numbers=dn)
    y = jnp.maximum(y * s2 + b2, 0.0)
    return jnp.transpose(y, (0, 3, 1, 2))


if __name__ == "__main__":
    in_channels, out_channels = 8, 4
    N = 2

    key = jax.random.PRNGKey(0)
    k1, k2, kp = jax.random.split(key, 3)

    # x1 comes from the deeper level: half the channels, half the spatial size.
    x1 = jax.random.normal(k1, (N, in_channels // 2, 8, 8), jnp.float32)    # NCHW
    x2 = jax.random.normal(k2, (N, in_channels // 2, 16, 16), jnp.float32)  # NCHW

    params = init_up_params(kp, in_channels, out_channels)

    up_fn = jax.jit(up_forward)
    out = up_fn(params, x1, x2)
    out = jax.block_until_ready(out)

    assert out.shape == (N, out_channels, 16, 16), out.shape
    assert bool(jnp.all(jnp.isfinite(out)))
    assert bool(jnp.all(out >= 0.0))  # final ReLU

    # Numerical check against the f32 XLA reference (bf16 MXU => loose tol).
    ref = _ref_forward(params, x1, x2)
    assert bool(jnp.allclose(out, ref, atol=5e-2, rtol=5e-2)), \
        float(jnp.max(jnp.abs(out - ref)))

    print("KERNEL_OK")
</pallas_src>

<mosaic_0001>
module attributes {stable_mosaic.version = 11 : i64} {
  func.func private @main(%arg0: i32) attributes {dimension_semantics = [#tpu.dimension_semantics<core_parallel>], iteration_bounds = array<i64: 2>, tpu.core_type = #tpu.core_type<sc_scalar_subcore>, window_params = []} {
    return
  }
}

module attributes {stable_mosaic.version = 11 : i64} {
  func.func private @main(%arg0: i32) attributes {dimension_semantics = [#tpu.dimension_semantics<core_parallel>], iteration_bounds = array<i64: 2>, tpu.core_type = #tpu.core_type<sc_scalar_subcore>, window_params = []} {
    return
  }
}

module attributes {stable_mosaic.version = 11 : i64} {
  func.func @kernel(%arg0: i32, %arg1: memref<1x4x256xf32, #tpu.memory_space<vmem>>, %arg2: memref<1x4x64xf32, #tpu.memory_space<vmem>>, %arg3: memref<64x256xf32, #tpu.memory_space<vmem>>, %arg4: memref<9x256xf32, #tpu.memory_space<vmem>>, %arg5: memref<9x4x8xbf16, #tpu.memory_space<vmem>>, %arg6: memref<4x1xf32, #tpu.memory_space<vmem>>, %arg7: memref<4x1xf32, #tpu.memory_space<vmem>>, %arg8: memref<9x4x4xbf16, #tpu.memory_space<vmem>>, %arg9: memref<4x1xf32, #tpu.memory_space<vmem>>, %arg10: memref<4x1xf32, #tpu.memory_space<vmem>>, %arg11: memref<1x4x256xf32, #tpu.memory_space<vmem>>, %arg12: memref<8x256xf32, #tpu.memory_space<vmem>>) attributes {dimension_semantics = [#tpu.dimension_semantics<parallel>], iteration_bounds = array<i64: 2>, scalar_prefetch = 0 : i64, scratch_operands = 1 : i64, tpu.core_type = #tpu.core_type<tc>, window_params = [{transform_indices = @transform_0, window_bounds = array<i64: 1, 4, 256>}, {transform_indices = @transform_1, window_bounds = array<i64: 1, 4, 64>}, {pipeline_mode = #tpu.pipeline_mode<synchronous>, transform_indices = @transform_2, window_bounds = array<i64: 64, 256>}, {pipeline_mode = #tpu.pipeline_mode<synchronous>, transform_indices = @transform_3, window_bounds = array<i64: 9, 256>}, {pipeline_mode = #tpu.pipeline_mode<synchronous>, transform_indices = @transform_4, window_bounds = array<i64: 9, 4, 8>}, {pipeline_mode = #tpu.pipeline_mode<synchronous>, transform_indices = @transform_5, window_bounds = array<i64: 4, 1>}, {pipeline_mode = #tpu.pipeline_mode<synchronous>, transform_indices = @transform_6, window_bounds = array<i64: 4, 1>}, {pipeline_mode = #tpu.pipeline_mode<synchronous>, transform_indices = @transform_7, window_bounds = array<i64: 9, 4, 4>}, {pipeline_mode = #tpu.pipeline_mode<synchronous>, transform_indices = @transform_8, window_bounds = array<i64: 4, 1>}, {pipeline_mode = #tpu.pipeline_mode<synchronous>, transform_indices = @transform_9, window_bounds = array<i64: 4, 1>}, {transform_indices = @transform_10, window_bounds = array<i64: 1, 4, 256>}]} {
    %c0 = arith.constant 0 : index
    %c0_0 = arith.constant 0 : index
    %c0_1 = arith.constant 0 : index
    %0 = vector.load %arg2[%c0, %c0_0, %c0_1] : memref<1x4x64xf32, #tpu.memory_space<vmem>>, vector<1x4x64xf32>
    %1 = vector.shape_cast %0 : vector<1x4x64xf32> to vector<4x64xf32>
    %c0_2 = arith.constant 0 : index
    %c0_3 = arith.constant 0 : index
    %2 = vector.load %arg3[%c0_2, %c0_3] : memref<64x256xf32, #tpu.memory_space<vmem>>, vector<64x256xf32>
    %cst = arith.constant dense<0.000000e+00> : vector<4x256xf32>
    %3 = tpu.matmul %1, %2, %cst {dimension_numbers = #tpu.dot_dimension_numbers<[1], [0], [0], [1], [0, 0, 1, 1], [], []>} : vector<4x64xf32>, vector<64x256xf32>, vector<4x256xf32> -> vector<4x256xf32>
    %c0_4 = arith.constant 0 : index
    %c0_5 = arith.constant 0 : index
    %c0_6 = arith.constant 0 : index
    %4 = vector.load %arg1[%c0_4, %c0_5, %c0_6] : memref<1x4x256xf32, #tpu.memory_space<vmem>>, vector<1x4x256xf32>
    %5 = vector.shape_cast %4 : vector<1x4x256xf32> to vector<4x256xf32>
    %c0_7 = arith.constant 0 : index
    %c0_8 = arith.constant 0 : index
    %6 = vector.load %arg12[%c0_7, %c0_8] : memref<8x256xf32, #tpu.memory_space<vmem>>, vector<4x256xf32>
    tpu.vector_store %arg12[%c0_7, %c0_8], %5 {strides = array<i32>} : memref<8x256xf32, #tpu.memory_space<vmem>>, vector<4x256xf32>,
    %c4 = arith.constant 4 : index
    %c0_9 = arith.constant 0 : index
    %7 = vector.load %arg12[%c4, %c0_9] : memref<8x256xf32, #tpu.memory_space<vmem>>, vector<4x256xf32>
    tpu.vector_store %arg12[%c4, %c0_9], %3 {strides = array<i32>} : memref<8x256xf32, #tpu.memory_space<vmem>>, vector<4x256xf32>,
    %c0_10 = arith.constant 0 : index
    %c0_11 = arith.constant 0 : index
    %8 = vector.load %arg12[%c0_10, %c0_11] : memref<8x256xf32, #tpu.memory_space<vmem>>, vector<8x256xf32>
    %c0_12 = arith.constant 0 : index
    %c0_13 = arith.constant 0 : index
    %9 = vector.load %arg4[%c0_12, %c0_13] : memref<9x256xf32, #tpu.memory_space<vmem>>, vector<9x256xf32>
    %c0_14 = arith.constant 0 : index
    %c0_15 = arith.constant 0 : index
    %c0_16 = arith.constant 0 : index
    %10 = vector.load %arg5[%c0_14, %c0_15, %c0_16] : memref<9x4x8xbf16, #tpu.memory_space<vmem>>, vector<9x4x8xbf16>
    %c0_17 = arith.constant 0 : index
    %c0_18 = arith.constant 0 : index
    %c0_19 = arith.constant 0 : index
    %11 = vector.load %arg8[%c0_17, %c0_18, %c0_19] : memref<9x4x4xbf16, #tpu.memory_space<vmem>>, vector<9x4x4xbf16>
    %cst_20 = arith.constant 0.000000e+00 : f32
    %12 = vector.broadcast %cst_20 : f32 to vector<4x256xf32>
    %c17_i32 = arith.constant 17 : i32
    %13 = tpu.dynamic_rotate %8 by %c17_i32 dim 1 : vector<8x256xf32>, i32 -> vector<8x256xf32>
    %14 = vector.extract_strided_slice %9 {offsets = [0, 0], sizes = [1, 256], strides = [1, 1]} : vector<9x256xf32> to vector<1x256xf32>
    %15 = vector.broadcast %14 : vector<1x256xf32> to vector<8x256xf32>
    %16 = arith.mulf %13, %15 : vector<8x256xf32>
    %17 = vector.extract_strided_slice %10 {offsets = [0, 0, 0], sizes = [1, 4, 8], strides = [1, 1, 1]} : vector<9x4x8xbf16> to vector<1x4x8xbf16>
    %18 = vector.shape_cast %17 : vector<1x4x8xbf16> to vector<4x8xbf16>
    %19 = arith.truncf %16 : vector<8x256xf32> to vector<8x256xbf16>
    %cst_21 = arith.constant dense<0.000000e+00> : vector<4x256xf32>
    %20 = tpu.matmul %18, %19, %cst_21 {dimension_numbers = #tpu.dot_dimension_numbers<[1], [0], [0], [1], [0, 0, 1, 1], [], []>} : vector<4x8xbf16>, vector<8x256xbf16>, vector<4x256xf32> -> vector<4x256xf32>
    %21 = arith.addf %12, %20 : vector<4x256xf32>
    %c16_i32 = arith.constant 16 : i32
    %22 = tpu.dynamic_rotate %8 by %c16_i32 dim 1 : vector<8x256xf32>, i32 -> vector<8x256xf32>
    %23 = vector.extract_strided_slice %9 {offsets = [1, 0], sizes = [1, 256], strides = [1, 1]} : vector<9x256xf32> to vector<1x256xf32>
    %24 = vector.broadcast %23 : vector<1x256xf32> to vector<8x256xf32>
    %25 = arith.mulf %22, %24 : vector<8x256xf32>
    %26 = vector.extract_strided_slice %10 {offsets = [1, 0, 0], sizes = [1, 4, 8], strides = [1, 1, 1]} : vector<9x4x8xbf16> to vector<1x4x8xbf16>
    %27 = vector.shape_cast %26 : vector<1x4x8xbf16> to vector<4x8xbf16>
    %28 = arith.truncf %25 : vector<8x256xf32> to vector<8x256xbf16>
    %cst_22 = arith.constant dense<0.000000e+00> : vector<4x256xf32>
    %29 = tpu.matmul %27, %28, %cst_22 {dimension_numbers = #tpu.dot_dimension_numbers<[1], [0], [0], [1], [0, 0, 1, 1], [], []>} : vector<4x8xbf16>, vector<8x256xbf16>, vector<4x256xf32> -> vector<4x256xf32>
    %30 = arith.addf %21, %29 : vector<4x256xf32>
    %c15_i32 = arith.constant 15 : i32
    %31 = tpu.dynamic_rotate %8 by %c15_i32 dim 1 : vector<8x256xf32>, i32 -> vector<8x256xf32>
    %32 = vector.extract_strided_slice %9 {offsets = [2, 0], sizes = [1, 256], strides = [1, 1]} : vector<9x256xf32> to vector<1x256xf32>
    %33 = vector.broadcast %32 : vector<1x256xf32> to vector<8x256xf32>
    %34 = arith.mulf %31, %33 : vector<8x256xf32>
    %35 = vector.extract_strided_slice %10 {offsets = [2, 0, 0], sizes = [1, 4, 8], strides = [1, 1, 1]} : vector<9x4x8xbf16> to vector<1x4x8xbf16>
    %36 = vector.shape_cast %35 : vector<1x4x8xbf16> to vector<4x8xbf16>
    %37 = arith.truncf %34 : vector<8x256xf32> to vector<8x256xbf16>
    %cst_23 = arith.constant dense<0.000000e+00> : vector<4x256xf32>
    %38 = tpu.matmul %36, %37, %cst_23 {dimension_numbers = #tpu.dot_dimension_numbers<[1], [0], [0], [1], [0, 0, 1, 1], [], []>} : vector<4x8xbf16>, vector<8x256xbf16>, vector<4x256xf32> -> vector<4x256xf32>
    %39 = arith.addf %30, %38 : vector<4x256xf32>
    %c1_i32 = arith.constant 1 : i32
    %40 = tpu.dynamic_rotate %8 by %c1_i32 dim 1 : vector<8x256xf32>, i32 -> vector<8x256xf32>
    %41 = vector.extract_strided_slice %9 {offsets = [3, 0], sizes = [1, 256], strides = [1, 1]} : vector<9x256xf32> to vector<1x256xf32>
    %42 = vector.broadcast %41 : vector<1x256xf32> to vector<8x256xf32>
    %43 = arith.mulf %40, %42 : vector<8x256xf32>
    %44 = vector.extract_strided_slice %10 {offsets = [3, 0, 0], sizes = [1, 4, 8], strides = [1, 1, 1]} : vector<9x4x8xbf16> to vector<1x4x8xbf16>
    %45 = vector.shape_cast %44 : vector<1x4x8xbf16> to vector<4x8xbf16>
    %46 = arith.truncf %43 : vector<8x256xf32> to vector<8x256xbf16>
    %cst_24 = arith.constant dense<0.000000e+00> : vector<4x256xf32>
    %47 = tpu.matmul %45, %46, %cst_24 {dimension_numbers = #tpu.dot_dimension_numbers<[1], [0], [0], [1], [0, 0, 1, 1], [], []>} : vector<4x8xbf16>, vector<8x256xbf16>, vector<4x256xf32> -> vector<4x256xf32>
    %48 = arith.addf %39, %47 : vector<4x256xf32>
    %49 = vector.extract_strided_slice %10 {offsets = [4, 0, 0], sizes = [1, 4, 8], strides = [1, 1, 1]} : vector<9x4x8xbf16> to vector<1x4x8xbf16>
    %50 = vector.shape_cast %49 : vector<1x4x8xbf16> to vector<4x8xbf16>
    %51 = arith.truncf %8 : vector<8x256xf32> to vector<8x256xbf16>
    %cst_25 = arith.constant dense<0.000000e+00> : vector<4x256xf32>
    %52 = tpu.matmul %50, %51, %cst_25 {dimension_numbers = #tpu.dot_dimension_numbers<[1], [0], [0], [1], [0, 0, 1, 1], [], []>} : vector<4x8xbf16>, vector<8x256xbf16>, vector<4x256xf32> -> vector<4x256xf32>
    %53 = arith.addf %48, %52 : vector<4x256xf32>
    %c255_i32 = arith.constant 255 : i32
    %54 = tpu.dynamic_rotate %8 by %c255_i32 dim 1 : vector<8x256xf32>, i32 -> vector<8x256xf32>
    %55 = vector.extract_strided_slice %9 {offsets = [5, 0], sizes = [1, 256], strides = [1, 1]} : vector<9x256xf32> to vector<1x256xf32>
    %56 = vector.broadcast %55 : vector<1x256xf32> to vector<8x256xf32>
    %57 = arith.mulf %54, %56 : vector<8x256xf32>
    %58 = vector.extract_strided_slice %10 {offsets = [5, 0, 0], sizes = [1, 4, 8], strides = [1, 1, 1]} : vector<9x4x8xbf16> to vector<1x4x8xbf16>
    %59 = vector.shape_cast %58 : vector<1x4x8xbf16> to vector<4x8xbf16>
    %60 = arith.truncf %57 : vector<8x256xf32> to vector<8x256xbf16>
    %cst_26 = arith.constant dense<0.000000e+00> : vector<4x256xf32>
    %61 = tpu.matmul %59, %60, %cst_26 {dimension_numbers = #tpu.dot_dimension_numbers<[1], [0], [0], [1], [0, 0, 1, 1], [], []>} : vector<4x8xbf16>, vector<8x256xbf16>, vector<4x256xf32> -> vector<4x256xf32>
    %62 = arith.addf %53, %61 : vector<4x256xf32>
    %c241_i32 = arith.constant 241 : i32
    %63 = tpu.dynamic_rotate %8 by %c241_i32 dim 1 : vector<8x256xf32>, i32 -> vector<8x256xf32>
    %64 = vector.extract_strided_slice %9 {offsets = [6, 0], sizes = [1, 256], strides = [1, 1]} : vector<9x256xf32> to vector<1x256xf32>
    %65 = vector.broadcast %64 : vector<1x256xf32> to vector<8x256xf32>
    %66 = arith.mulf %63, %65 : vector<8x256xf32>
    %67 = vector.extract_strided_slice %10 {offsets = [6, 0, 0], sizes = [1, 4, 8], strides = [1, 1, 1]} : vector<9x4x8xbf16> to vector<1x4x8xbf16>
    %68 = vector.shape_cast %67 : vector<1x4x8xbf16> to vector<4x8xbf16>
    %69 = arith.truncf %66 : vector<8x256xf32> to vector<8x256xbf16>
    %cst_27 = arith.constant dense<0.000000e+00> : vector<4x256xf32>
    %70 = tpu.matmul %68, %69, %cst_27 {dimension_numbers = #tpu.dot_dimension_numbers<[1], [0], [0], [1], [0, 0, 1, 1], [], []>} : vector<4x8xbf16>, vector<8x256xbf16>, vector<4x256xf32> -> vector<4x256xf32>
    %71 = arith.addf %62, %70 : vector<4x256xf32>
    %c240_i32 = arith.constant 240 : i32
    %72 = tpu.dynamic_rotate %8 by %c240_i32 dim 1 : vector<8x256xf32>, i32 -> vector<8x256xf32>
    %73 = vector.extract_strided_slice %9 {offsets = [7, 0], sizes = [1, 256], strides = [1, 1]} : vector<9x256xf32> to vector<1x256xf32>
    %74 = vector.broadcast %73 : vector<1x256xf32> to vector<8x256xf32>
    %75 = arith.mulf %72, %74 : vector<8x256xf32>
    %76 = vector.extract_strided_slice %10 {offsets = [7, 0, 0], sizes = [1, 4, 8], strides = [1, 1, 1]} : vector<9x4x8xbf16> to vector<1x4x8xbf16>
    %77 = vector.shape_cast %76 : vector<1x4x8xbf16> to vector<4x8xbf16>
    %78 = arith.truncf %75 : vector<8x256xf32> to vector<8x256xbf16>
    %cst_28 = arith.constant dense<0.000000e+00> : vector<4x256xf32>
    %79 = tpu.matmul %77, %78, %cst_28 {dimension_numbers = #tpu.dot_dimension_numbers<[1], [0], [0], [1], [0, 0, 1, 1], [], []>} : vector<4x8xbf16>, vector<8x256xbf16>, vector<4x256xf32> -> vector<4x256xf32>
    %80 = arith.addf %71, %79 : vector<4x256xf32>
    %c239_i32 = arith.constant 239 : i32
    %81 = tpu.dynamic_rotate %8 by %c239_i32 dim 1 : vector<8x256xf32>, i32 -> vector<8x256xf32>
    %82 = vector.extract_strided_slice %9 {offsets = [8, 0], sizes = [1, 256], strides = [1, 1]} : vector<9x256xf32> to vector<1x256xf32>
    %83 = vector.broadcast %82 : vector<1x256xf32> to vector<8x256xf32>
    %84 = arith.mulf %81, %83 : vector<8x256xf32>
    %85 = vector.extract_strided_slice %10 {offsets = [8, 0, 0], sizes = [1, 4, 8], strides = [1, 1, 1]} : vector<9x4x8xbf16> to vector<1x4x8xbf16>
    %86 = vector.shape_cast %85 : vector<1x4x8xbf16> to vector<4x8xbf16>
    %87 = arith.truncf %84 : vector<8x256xf32> to vector<8x256xbf16>
    %cst_29 = arith.constant dense<0.000000e+00> : vector<4x256xf32>
    %88 = tpu.matmul %86, %87, %cst_29 {dimension_numbers = #tpu.dot_dimension_numbers<[1], [0], [0], [1], [0, 0, 1, 1], [], []>} : vector<4x8xbf16>, vector<8x256xbf16>, vector<4x256xf32> -> vector<4x256xf32>
    %89 = arith.addf %80, %88 : vector<4x256xf32>
    %c0_30 = arith.constant 0 : index
    %c0_31 = arith.constant 0 : index
    %90 = vector.load %arg6[%c0_30, %c0_31] : memref<4x1xf32, #tpu.memory_space<vmem>>, vector<4x1xf32>
    %91 = vector.broadcast %90 : vector<4x1xf32> to vector<4x256xf32>
    %92 = arith.mulf %89, %91 : vector<4x256xf32>
    %c0_32 = arith.constant 0 : index
    %c0_33 = arith.constant 0 : index
    %93 = vector.load %arg7[%c0_32, %c0_33] : memref<4x1xf32, #tpu.memory_space<vmem>>, vector<4x1xf32>
    %94 = vector.broadcast %93 : vector<4x1xf32> to vector<4x256xf32>
    %95 = arith.addf %92, %94 : vector<4x256xf32>
    %cst_34 = arith.constant 0.000000e+00 : f32
    %96 = vector.broadcast %cst_34 : f32 to vector<4x256xf32>
    %97 = arith.maximumf %95, %96 : vector<4x256xf32>
    %cst_35 = arith.constant 0.000000e+00 : f32
    %98 = vector.broadcast %cst_35 : f32 to vector<4x256xf32>
    %c17_i32_36 = arith.constant 17 : i32
    %99 = tpu.dynamic_rotate %97 by %c17_i32_36 dim 1 : vector<4x256xf32>, i32 -> vector<4x256xf32>
    %100 = vector.extract_strided_slice %9 {offsets = [0, 0], sizes = [1, 256], strides = [1, 1]} : vector<9x256xf32> to vector<1x256xf32>
    %101 = vector.broadcast %100 : vector<1x256xf32> to vector<4x256xf32>
    %102 = arith.mulf %99, %101 : vector<4x256xf32>
    %103 = vector.extract_strided_slice %11 {offsets = [0, 0, 0], sizes = [1, 4, 4], strides = [1, 1, 1]} : vector<9x4x4xbf16> to vector<1x4x4xbf16>
    %104 = vector.shape_cast %103 : vector<1x4x4xbf16> to vector<4x4xbf16>
    %105 = arith.truncf %102 : vector<4x256xf32> to vector<4x256xbf16>
    %cst_37 = arith.constant dense<0.000000e+00> : vector<4x256xf32>
    %106 = tpu.matmul %104, %105, %cst_37 {dimension_numbers = #tpu.dot_dimension_numbers<[1], [0], [0], [1], [0, 0, 1, 1], [], []>} : vector<4x4xbf16>, vector<4x256xbf16>, vector<4x256xf32> -> vector<4x256xf32>
    %107 = arith.addf %98, %106 : vector<4x256xf32>
    %c16_i32_38 = arith.constant 16 : i32
    %108 = tpu.dynamic_rotate %97 by %c16_i32_38 dim 1 : vector<4x256xf32>, i32 -> vector<4x256xf32>
    %109 = vector.extract_strided_slice %9 {offsets = [1, 0], sizes = [1, 256], strides = [1, 1]} : vector<9x256xf32> to vector<1x256xf32>
    %110 = vector.broadcast %109 : vector<1x256xf32> to vector<4x256xf32>
    %111 = arith.mulf %108, %110 : vector<4x256xf32>
    %112 = vector.extract_strided_slice %11 {offsets = [1, 0, 0], sizes = [1, 4, 4], strides = [1, 1, 1]} : vector<9x4x4xbf16> to vector<1x4x4xbf16>
    %113 = vector.shape_cast %112 : vector<1x4x4xbf16> to vector<4x4xbf16>
    %114 = arith.truncf %111 : vector<4x256xf32> to vector<4x256xbf16>
    %cst_39 = arith.constant dense<0.000000e+00> : vector<4x256xf32>
    %115 = tpu.matmul %113, %114, %cst_39 {dimension_numbers = #tpu.dot_dimension_numbers<[1], [0], [0], [1], [0, 0, 1, 1], [], []>} : vector<4x4xbf16>, vector<4x256xbf16>, vector<4x256xf32> -> vector<4x256xf32>
    %116 = arith.addf %107, %115 : vector<4x256xf32>
    %c15_i32_40 = arith.constant 15 : i32
    %117 = tpu.dynamic_rotate %97 by %c15_i32_40 dim 1 : vector<4x256xf32>, i32 -> vector<4x256xf32>
    %118 = vector.extract_strided_slice %9 {offsets = [2, 0], sizes = [1, 256], strides = [1, 1]} : vector<9x256xf32> to vector<1x256xf32>
    %119 = vector.broadcast %118 : vector<1x256xf32> to vector<4x256xf32>
    %120 = arith.mulf %117, %119 : vector<4x256xf32>
    %121 = vector.extract_strided_slice %11 {offsets = [2, 0, 0], sizes = [1, 4, 4], strides = [1, 1, 1]} : vector<9x4x4xbf16> to vector<1x4x4xbf16>
    %122 = vector.shape_cast %121 : vector<1x4x4xbf16> to vector<4x4xbf16>
    %123 = arith.truncf %120 : vector<4x256xf32> to vector<4x256xbf16>
    %cst_41 = arith.constant dense<0.000000e+00> : vector<4x256xf32>
    %124 = tpu.matmul %122, %123, %cst_41 {dimension_numbers = #tpu.dot_dimension_numbers<[1], [0], [0], [1], [0, 0, 1, 1], [], []>} : vector<4x4xbf16>, vector<4x256xbf16>, vector<4x256xf32> -> vector<4x256xf32>
    %125 = arith.addf %116, %124 : vector<4x256xf32>
    %c1_i32_42 = arith.constant 1 : i32
    %126 = tpu.dynamic_rotate %97 by %c1_i32_42 dim 1 : vector<4x256xf32>, i32 -> vector<4x256xf32>
    %127 = vector.extract_strided_slice %9 {offsets = [3, 0], sizes = [1, 256], strides = [1, 1]} : vector<9x256xf32> to vector<1x256xf32>
    %128 = vector.broadcast %127 : vector<1x256xf32> to vector<4x256xf32>
    %129 = arith.mulf %126, %128 : vector<4x256xf32>
    %130 = vector.extract_strided_slice %11 {offsets = [3, 0, 0], sizes = [1, 4, 4], strides = [1, 1, 1]} : vector<9x4x4xbf16> to vector<1x4x4xbf16>
    %131 = vector.shape_cast %130 : vector<1x4x4xbf16> to vector<4x4xbf16>
    %132 = arith.truncf %129 : vector<4x256xf32> to vector<4x256xbf16>
    %cst_43 = arith.constant dense<0.000000e+00> : vector<4x256xf32>
    %133 = tpu.matmul %131, %132, %cst_43 {dimension_numbers = #tpu.dot_dimension_numbers<[1], [0], [0], [1], [0, 0, 1, 1], [], []>} : vector<4x4xbf16>, vector<4x256xbf16>, vector<4x256xf32> -> vector<4x256xf32>
    %134 = arith.addf %125, %133 : vector<4x256xf32>
    %135 = vector.extract_strided_slice %11 {offsets = [4, 0, 0], sizes = [1, 4, 4], strides = [1, 1, 1]} : vector<9x4x4xbf16> to vector<1x4x4xbf16>
    %136 = vector.shape_cast %135 : vector<1x4x4xbf16> to vector<4x4xbf16>
    %137 = arith.truncf %97 : vector<4x256xf32> to vector<4x256xbf16>
    %cst_44 = arith.constant dense<0.000000e+00> : vector<4x256xf32>
    %138 = tpu.matmul %136, %137, %cst_44 {dimension_numbers = #tpu.dot_dimension_numbers<[1], [0], [0], [1], [0, 0, 1, 1], [], []>} : vector<4x4xbf16>, vector<4x256xbf16>, vector<4x256xf32> -> vector<4x256xf32>
    %139 = arith.addf %134, %138 : vector<4x256xf32>
    %c255_i32_45 = arith.constant 255 : i32
    %140 = tpu.dynamic_rotate %97 by %c255_i32_45 dim 1 : vector<4x256xf32>, i32 -> vector<4x256xf32>
    %141 = vector.extract_strided_slice %9 {offsets = [5, 0], sizes = [1, 256], strides = [1, 1]} : vector<9x256xf32> to vector<1x256xf32>
    %142 = vector.broadcast %141 : vector<1x256xf32> to vector<4x256xf32>
    %143 = arith.mulf %140, %142 : vector<4x256xf32>
    %144 = vector.extract_strided_slice %11 {offsets = [5, 0, 0], sizes = [1, 4, 4], strides = [1, 1, 1]} : vector<9x4x4xbf16> to vector<1x4x4xbf16>
    %145 = vector.shape_cast %144 : vector<1x4x4xbf16> to vector<4x4xbf16>
    %146 = arith.truncf %143 : vector<4x256xf32> to vector<4x256xbf16>
    %cst_46 = arith.constant dense<0.000000e+00> : vector<4x256xf32>
    %147 = tpu.matmul %145, %146, %cst_46 {dimension_numbers = #tpu.dot_dimension_numbers<[1], [0], [0], [1], [0, 0, 1, 1], [], []>} : vector<4x4xbf16>, vector<4x256xbf16>, vector<4x256xf32> -> vector<4x256xf32>
    %148 = arith.addf %139, %147 : vector<4x256xf32>
    %c241_i32_47 = arith.constant 241 : i32
    %149 = tpu.dynamic_rotate %97 by %c241_i32_47 dim 1 : vector<4x256xf32>, i32 -> vector<4x256xf32>
    %150 = vector.extract_strided_slice %9 {offsets = [6, 0], sizes = [1, 256], strides = [1, 1]} : vector<9x256xf32> to vector<1x256xf32>
    %151 = vector.broadcast %150 : vector<1x256xf32> to vector<4x256xf32>
    %152 = arith.mulf %149, %151 : vector<4x256xf32>
    %153 = vector.extract_strided_slice %11 {offsets = [6, 0, 0], sizes = [1, 4, 4], strides = [1, 1, 1]} : vector<9x4x4xbf16> to vector<1x4x4xbf16>
    %154 = vector.shape_cast %153 : vector<1x4x4xbf16> to vector<4x4xbf16>
    %155 = arith.truncf %152 : vector<4x256xf32> to vector<4x256xbf16>
    %cst_48 = arith.constant dense<0.000000e+00> : vector<4x256xf32>
    %156 = tpu.matmul %154, %155, %cst_48 {dimension_numbers = #tpu.dot_dimension_numbers<[1], [0], [0], [1], [0, 0, 1, 1], [], []>} : vector<4x4xbf16>, vector<4x256xbf16>, vector<4x256xf32> -> vector<4x256xf32>
    %157 = arith.addf %148, %156 : vector<4x256xf32>
    %c240_i32_49 = arith.constant 240 : i32
    %158 = tpu.dynamic_rotate %97 by %c240_i32_49 dim 1 : vector<4x256xf32>, i32 -> vector<4x256xf32>
    %159 = vector.extract_strided_slice %9 {offsets = [7, 0], sizes = [1, 256], strides = [1, 1]} : vector<9x256xf32> to vector<1x256xf32>
    %160 = vector.broadcast %159 : vector<1x256xf32> to vector<4x256xf32>
    %161 = arith.mulf %158, %160 : vector<4x256xf32>
    %162 = vector.extract_strided_slice %11 {offsets = [7, 0, 0], sizes = [1, 4, 4], strides = [1, 1, 1]} : vector<9x4x4xbf16> to vector<1x4x4xbf16>
    %163 = vector.shape_cast %162 : vector<1x4x4xbf16> to vector<4x4xbf16>
    %164 = arith.truncf %161 : vector<4x256xf32> to vector<4x256xbf16>
    %cst_50 = arith.constant dense<0.000000e+00> : vector<4x256xf32>
    %165 = tpu.matmul %163, %164, %cst_50 {dimension_numbers = #tpu.dot_dimension_numbers<[1], [0], [0], [1], [0, 0, 1, 1], [], []>} : vector<4x4xbf16>, vector<4x256xbf16>, vector<4x256xf32> -> vector<4x256xf32>
    %166 = arith.addf %157, %165 : vector<4x256xf32>
    %c239_i32_51 = arith.constant 239 : i32
    %167 = tpu.dynamic_rotate %97 by %c239_i32_51 dim 1 : vector<4x256xf32>, i32 -> vector<4x256xf32>
    %168 = vector.extract_strided_slice %9 {offsets = [8, 0], sizes = [1, 256], strides = [1, 1]} : vector<9x256xf32> to vector<1x256xf32>
    %169 = vector.broadcast %168 : vector<1x256xf32> to vector<4x256xf32>
    %170 = arith.mulf %167, %169 : vector<4x256xf32>
    %171 = vector.extract_strided_slice %11 {offsets = [8, 0, 0], sizes = [1, 4, 4], strides = [1, 1, 1]} : vector<9x4x4xbf16> to vector<1x4x4xbf16>
    %172 = vector.shape_cast %171 : vector<1x4x4xbf16> to vector<4x4xbf16>
    %173 = arith.truncf %170 : vector<4x256xf32> to vector<4x256xbf16>
    %cst_52 = arith.constant dense<0.000000e+00> : vector<4x256xf32>
    %174 = tpu.matmul %172, %173, %cst_52 {dimension_numbers = #tpu.dot_dimension_numbers<[1], [0], [0], [1], [0, 0, 1, 1], [], []>} : vector<4x4xbf16>, vector<4x256xbf16>, vector<4x256xf32> -> vector<4x256xf32>
    %175 = arith.addf %166, %174 : vector<4x256xf32>
    %c0_53 = arith.constant 0 : index
    %c0_54 = arith.constant 0 : index
    %176 = vector.load %arg9[%c0_53, %c0_54] : memref<4x1xf32, #tpu.memory_space<vmem>>, vector<4x1xf32>
    %177 = vector.broadcast %176 : vector<4x1xf32> to vector<4x256xf32>
    %178 = arith.mulf %175, %177 : vector<4x256xf32>
    %c0_55 = arith.constant 0 : index
    %c0_56 = arith.constant 0 : index
    %179 = vector.load %arg10[%c0_55, %c0_56] : memref<4x1xf32, #tpu.memory_space<vmem>>, vector<4x1xf32>
    %180 = vector.broadcast %179 : vector<4x1xf32> to vector<4x256xf32>
    %181 = arith.addf %178, %180 : vector<4x256xf32>
    %cst_57 = arith.constant 0.000000e+00 : f32
    %182 = vector.broadcast %cst_57 : f32 to vector<4x256xf32>
    %183 = arith.maximumf %181, %182 : vector<4x256xf32>
    %c0_58 = arith.constant 0 : index
    %c0_59 = arith.constant 0 : index
    %c0_60 = arith.constant 0 : index
    %184 = vector.load %arg11[%c0_58, %c0_59, %c0_60] : memref<1x4x256xf32, #tpu.memory_space<vmem>>, vector<1x4x256xf32>
    %185 = vector.shape_cast %184 : vector<1x4x256xf32> to vector<4x256xf32>
    %186 = vector.shape_cast %183 : vector<4x256xf32> to vector<1x4x256xf32>
    tpu.vector_store %arg11[%c0_58, %c0_59, %c0_60], %186 {strides = array<i32>} : memref<1x4x256xf32, #tpu.memory_space<vmem>>, vector<1x4x256xf32>,
    return
  }
  func.func @transform_0(%arg0: i32) -> (i32, i32, i32) {
    %c0_i32 = arith.constant 0 : i32
    %c0_i32_0 = arith.constant 0 : i32
    %c0_i32_1 = arith.constant 0 : i32
    return %arg0, %c0_i32, %c0_i32_0 : i32, i32, i32
  }
  func.func @transform_1(%arg0: i32) -> (i32, i32, i32) {
    %c0_i32 = arith.constant 0 : i32
    %c0_i32_0 = arith.constant 0 : i32
    %c0_i32_1 = arith.constant 0 : i32
    return %arg0, %c0_i32, %c0_i32_0 : i32, i32, i32
  }
  func.func @transform_2(%arg0: i32) -> (i32, i32) {
    %c0_i32 = arith.constant 0 : i32
    %c0_i32_0 = arith.constant 0 : i32
    %c0_i32_1 = arith.constant 0 : i32
    return %c0_i32, %c0_i32_0 : i32, i32
  }
  func.func @transform_3(%arg0: i32) -> (i32, i32) {
    %c0_i32 = arith.constant 0 : i32
    %c0_i32_0 = arith.constant 0 : i32
    %c0_i32_1 = arith.constant 0 : i32
    return %c0_i32, %c0_i32_0 : i32, i32
  }
  func.func @transform_4(%arg0: i32) -> (i32, i32, i32) {
    %c0_i32 = arith.constant 0 : i32
    %c0_i32_0 = arith.constant 0 : i32
    %c0_i32_1 = arith.constant 0 : i32
    %c0_i32_2 = arith.constant 0 : i32
    return %c0_i32, %c0_i32_0, %c0_i32_1 : i32, i32, i32
  }
  func.func @transform_5(%arg0: i32) -> (i32, i32) {
    %c0_i32 = arith.constant 0 : i32
    %c0_i32_0 = arith.constant 0 : i32
    %c0_i32_1 = arith.constant 0 : i32
    return %c0_i32, %c0_i32_0 : i32, i32
  }
  func.func @transform_6(%arg0: i32) -> (i32, i32) {
    %c0_i32 = arith.constant 0 : i32
    %c0_i32_0 = arith.constant 0 : i32
    %c0_i32_1 = arith.constant 0 : i32
    return %c0_i32, %c0_i32_0 : i32, i32
  }
  func.func @transform_7(%arg0: i32) -> (i32, i32, i32) {
    %c0_i32 = arith.constant 0 : i32
    %c0_i32_0 = arith.constant 0 : i32
    %c0_i32_1 = arith.constant 0 : i32
    %c0_i32_2 = arith.constant 0 : i32
    return %c0_i32, %c0_i32_0, %c0_i32_1 : i32, i32, i32
  }
  func.func @transform_8(%arg0: i32) -> (i32, i32) {
    %c0_i32 = arith.constant 0 : i32
    %c0_i32_0 = arith.constant 0 : i32
    %c0_i32_1 = arith.constant 0 : i32
    return %c0_i32, %c0_i32_0 : i32, i32
  }
  func.func @transform_9(%arg0: i32) -> (i32, i32) {
    %c0_i32 = arith.constant 0 : i32
    %c0_i32_0 = arith.constant 0 : i32
    %c0_i32_1 = arith.constant 0 : i32
    return %c0_i32, %c0_i32_0 : i32, i32
  }
  func.func @transform_10(%arg0: i32) -> (i32, i32, i32) {
    %c0_i32 = arith.constant 0 : i32
    %c0_i32_0 = arith.constant 0 : i32
    %c0_i32_1 = arith.constant 0 : i32
    return %arg0, %c0_i32, %c0_i32_0 : i32, i32, i32
  }
}

</mosaic_0001>

<llo_original>
// kernel: up_forward.1
$region0: #{up_forward.1}
  #allocation0 [shape = 'u32[]', space=smem, size = 0x4, offset = 0x4, fixed_abs, tag = 'smem constant byte address 0x4 - core index']
  #allocation1 [shape = 'u32[144,128]{1,0:T(1,128)}', space=vmem, size = 0x12000, scoped, tag = 'internal scratch']
  #allocation2 [shape = 'f32[8,256]{1,0:T(8,128)}', space=vmem, size = 0x2000, scoped, tag = 'scratch operand']
  %s0 = inlined_call_operand.vmem [shape: f32[2,4,256], index: 0, kind: input, shape index: {}]
  %s1 = inlined_call_operand.vmem [shape: f32[2,4,64], index: 1, kind: input, shape index: {}]
  %s2 = inlined_call_operand.vmem [shape: f32[64,256], index: 2, kind: input, shape index: {}]
  %s3 = inlined_call_operand.vmem [shape: f32[9,256], index: 3, kind: input, shape index: {}]
  %s4 = inlined_call_operand.vmem [shape: bf16[9,4,8], index: 4, kind: input, shape index: {}]
  %s5 = inlined_call_operand.vmem [shape: f32[4,1], index: 5, kind: input, shape index: {}]
  %s6 = inlined_call_operand.vmem [shape: f32[4,1], index: 6, kind: input, shape index: {}]
  %s7 = inlined_call_operand.vmem [shape: bf16[9,4,4], index: 7, kind: input, shape index: {}]
  %s8 = inlined_call_operand.vmem [shape: f32[4,1], index: 8, kind: input, shape index: {}]
  %s9 = inlined_call_operand.vmem [shape: f32[4,1], index: 9, kind: input, shape index: {}]
  %s10 = inlined_call_operand.vmem [shape: f32[2,4,256], index: 10, kind: output, shape index: {}]
  %s11 = sld [smem:[#allocation0]]
  $region73: #{up_forward.1} parent=0
    _
  %s13 = ssub.s32 1, %s11
  %s14 = scalar_select 0, %s13, %s11
  loop: start=0, step=1, limit=4
  $region2: #{up_forward.1} parent=0 // loop_pre_header
    _
  $region3: #{up_forward.1} parent=0 // loop_header
    %s16 = sphi 0, %s20
    %p17 = scmp.ge.s32.totalorder %s16, 4
    %s26 = sphi 0, %s28
    %s29 = sphi 0, %s26
    %s30 = sphi 0, %s29
    %s46 = sphi 0, %s30
    %s52 = sphi 0, %s54
    %s55 = sphi 0, %s52
    %s56 = sphi 0, %s55
    %s72 = sphi 0, %s56
    %s76 = sphi 0, %s76
    %s78 = sphi 0, %s76
    %s79 = sphi 0, %s78
    %s93 = sphi 0, %s79
    %s97 = sphi 0, %s97
    %s99 = sphi 0, %s97
    %s100 = sphi 0, %s99
    %s114 = sphi 0, %s100
    %s118 = sphi 0, %s118
    %s120 = sphi 0, %s118
    %s121 = sphi 0, %s120
    %s135 = sphi 0, %s121
    %s139 = sphi 0, %s139
    %s141 = sphi 0, %s139
    %s142 = sphi 0, %s141
    %s156 = sphi 0, %s142
    %s160 = sphi 0, %s160
    %s162 = sphi 0, %s160
    %s163 = sphi 0, %s162
    %s177 = sphi 0, %s163
    %s181 = sphi 0, %s181
    %s183 = sphi 0, %s181
    %s184 = sphi 0, %s183
    %s198 = sphi 0, %s184
    %s202 = sphi 0, %s202
    %s204 = sphi 0, %s202
    %s205 = sphi 0, %s204
    %s219 = sphi 0, %s205
    %s223 = sphi 0, %s223
    %s225 = sphi 0, %s223
    %s226 = sphi 0, %s225
    %s240 = sphi 0, %s226
    %s246 = sphi 0, %s248
    %s249 = sphi 0, %s246
    %s250 = sphi 0, %s249
    %s266 = sphi 0, %s250
  $region4: #{up_forward.1} parent=0 // loop_header_branch
    %19 = sbr.rel (%p17) target = $region8
  $region5: #{up_forward.1} parent=0 // loop_body
    %s21 = ssub.s32 %s16, 1
    %s22 = ssub.s32 %s16, 2
    %s23 = sadd.s32 %s16, 1
    %s24 = ssub.s32 %s16, %s23
    %p25 = scmp.eq.s32.totalorder %s24, 0
    %s27 = sadd.s32 %s26, 1
    %s28 = scalar_select %p25, %s26, %s27
    %p31 = pneg %p25
    %p32 = scmp.eq.s32.totalorder %s16, 1
    %p33 = por %p31, %p32
    %p34 = scmp.ne.s32.totalorder %s26, %s29
    %p35 = scmp.eq.s32.totalorder %s16, 0
    %p36 = por %p34, %p35
    %p37 = scmp.ne.s32.totalorder %s26, %s29
    %p38 = scmp.eq.s32.totalorder %s21, 1
    %p39 = por %p37, %p38
    %p40 = scmp.ne.s32.totalorder %s29, %s30
    %p41 = scmp.eq.s32.totalorder %s21, 0
    %p42 = por %p40, %p41
    %p43 = scmp.ne.s32.totalorder %s29, %s30
    %p44 = scmp.eq.s32.totalorder %s22, 1
    %p45 = por %p43, %p44
    %p47 = scmp.ne.s32.totalorder %s30, %s46
    %p48 = scmp.eq.s32.totalorder %s22, 0
    %p49 = por %p47, %p48
    %s50 = ssub.s32 %s16, %s23
    %p51 = scmp.eq.s32.totalorder %s50, 0
    %s53 = sadd.s32 %s52, 1
    %s54 = scalar_select %p51, %s52, %s53
    %p57 = pneg %p51
    %p58 = scmp.eq.s32.totalorder %s16, 1
    %p59 = por %p57, %p58
    %p60 = scmp.ne.s32.totalorder %s52, %s55
    %p61 = scmp.eq.s32.totalorder %s16, 0
    %p62 = por %p60, %p61
    %p63 = scmp.ne.s32.totalorder %s52, %s55
    %p64 = scmp.eq.s32.totalorder %s21, 1
    %p65 = por %p63, %p64
    %p66 = scmp.ne.s32.totalorder %s55, %s56
    %p67 = scmp.eq.s32.totalorder %s21, 0
    %p68 = por %p66, %p67
    %p69 = scmp.ne.s32.totalorder %s55, %s56
    %p70 = scmp.eq.s32.totalorder %s22, 1
    %p71 = por %p69, %p70
    %p73 = scmp.ne.s32.totalorder %s56, %s72
    %p74 = scmp.eq.s32.totalorder %s22, 0
    %p75 = por %p73, %p74
    %s77 = sadd.s32 %s76, 1
    %p80 = scmp.eq.s32.totalorder %s16, 1
    %p81 = scmp.ne.s32.totalorder %s76, %s78
    %p82 = scmp.eq.s32.totalorder %s16, 0
    %p83 = por %p81, %p82
    %p84 = scmp.ne.s32.totalorder %s76, %s78
    %p85 = scmp.eq.s32.totalorder %s21, 1
    %p86 = por %p84, %p85
    %p87 = scmp.ne.s32.totalorder %s78, %s79
    %p88 = scmp.eq.s32.totalorder %s21, 0
    %p89 = por %p87, %p88
    %p90 = scmp.ne.s32.totalorder %s78, %s79
    %p91 = scmp.eq.s32.totalorder %s22, 1
    %p92 = por %p90, %p91
    %p94 = scmp.ne.s32.totalorder %s79, %s93
    %p95 = scmp.eq.s32.totalorder %s22, 0
    %p96 = por %p94, %p95
    %s98 = sadd.s32 %s97, 1
    %p101 = scmp.eq.s32.totalorder %s16, 1
    %p102 = scmp.ne.s32.totalorder %s97, %s99
    %p103 = scmp.eq.s32.totalorder %s16, 0
    %p104 = por %p102, %p103
    %p105 = scmp.ne.s32.totalorder %s97, %s99
    %p106 = scmp.eq.s32.totalorder %s21, 1
    %p107 = por %p105, %p106
    %p108 = scmp.ne.s32.totalorder %s99, %s100
    %p109 = scmp.eq.s32.totalorder %s21, 0
    %p110 = por %p108, %p109
    %p111 = scmp.ne.s32.totalorder %s99, %s100
    %p112 = scmp.eq.s32.totalorder %s22, 1
    %p113 = por %p111, %p112
    %p115 = scmp.ne.s32.totalorder %s100, %s114
    %p116 = scmp.eq.s32.totalorder %s22, 0
    %p117 = por %p115, %p116
    %s119 = sadd.s32 %s118, 1
    %p122 = scmp.eq.s32.totalorder %s16, 1
    %p123 = scmp.ne.s32.totalorder %s118, %s120
    %p124 = scmp.eq.s32.totalorder %s16, 0
    %p125 = por %p123, %p124
    %p126 = scmp.ne.s32.totalorder %s118, %s120
    %p127 = scmp.eq.s32.totalorder %s21, 1
    %p128 = por %p126, %p127
    %p129 = scmp.ne.s32.totalorder %s120, %s121
    %p130 = scmp.eq.s32.totalorder %s21, 0
    %p131 = por %p129, %p130
    %p132 = scmp.ne.s32.totalorder %s120, %s121
    %p133 = scmp.eq.s32.totalorder %s22, 1
    %p134 = por %p132, %p133
    %p136 = scmp.ne.s32.totalorder %s121, %s135
    %p137 = scmp.eq.s32.totalorder %s22, 0
    %p138 = por %p136, %p137
    %s140 = sadd.s32 %s139, 1
    %p143 = scmp.eq.s32.totalorder %s16, 1
    %p144 = scmp.ne.s32.totalorder %s139, %s141
    %p145 = scmp.eq.s32.totalorder %s16, 0
    %p146 = por %p144, %p145
    %p147 = scmp.ne.s32.totalorder %s139, %s141
    %p148 = scmp.eq.s32.totalorder %s21, 1
    %p149 = por %p147, %p148
    %p150 = scmp.ne.s32.totalorder %s141, %s142
    %p151 = scmp.eq.s32.totalorder %s21, 0
    %p152 = por %p150, %p151
    %p153 = scmp.ne.s32.totalorder %s141, %s142
    %p154 = scmp.eq.s32.totalorder %s22, 1
    %p155 = por %p153, %p154
    %p157 = scmp.ne.s32.totalorder %s142, %s156
    %p158 = scmp.eq.s32.totalorder %s22, 0
    %p159 = por %p157, %p158
    %s161 = sadd.s32 %s160, 1
    %p164 = scmp.eq.s32.totalorder %s16, 1
    %p165 = scmp.ne.s32.totalorder %s160, %s162
    %p166 = scmp.eq.s32.totalorder %s16, 0
    %p167 = por %p165, %p166
    %p168 = scmp.ne.s32.totalorder %s160, %s162
    %p169 = scmp.eq.s32.totalorder %s21, 1
    %p170 = por %p168, %p169
    %p171 = scmp.ne.s32.totalorder %s162, %s163
    %p172 = scmp.eq.s32.totalorder %s21, 0
    %p173 = por %p171, %p172
    %p174 = scmp.ne.s32.totalorder %s162, %s163
    %p175 = scmp.eq.s32.totalorder %s22, 1
    %p176 = por %p174, %p175
    %p178 = scmp.ne.s32.totalorder %s163, %s177
    %p179 = scmp.eq.s32.totalorder %s22, 0
    %p180 = por %p178, %p179
    %s182 = sadd.s32 %s181, 1
    %p185 = scmp.eq.s32.totalorder %s16, 1
    %p186 = scmp.ne.s32.totalorder %s181, %s183
    %p187 = scmp.eq.s32.totalorder %s16, 0
    %p188 = por %p186, %p187
    %p189 = scmp.ne.s32.totalorder %s181, %s183
    %p190 = scmp.eq.s32.totalorder %s21, 1
    %p191 = por %p189, %p190
    %p192 = scmp.ne.s32.totalorder %s183, %s184
    %p193 = scmp.eq.s32.totalorder %s21, 0
    %p194 = por %p192, %p193
    %p195 = scmp.ne.s32.totalorder %s183, %s184
    %p196 = scmp.eq.s32.totalorder %s22, 1
    %p197 = por %p195, %p196
    %p199 = scmp.ne.s32.totalorder %s184, %s198
    %p200 = scmp.eq.s32.totalorder %s22, 0
    %p201 = por %p199, %p200
    %s203 = sadd.s32 %s202, 1
    %p206 = scmp.eq.s32.totalorder %s16, 1
    %p207 = scmp.ne.s32.totalorder %s202, %s204
    %p208 = scmp.eq.s32.totalorder %s16, 0
    %p209 = por %p207, %p208
    %p210 = scmp.ne.s32.totalorder %s202, %s204
    %p211 = scmp.eq.s32.totalorder %s21, 1
    %p212 = por %p210, %p211
    %p213 = scmp.ne.s32.totalorder %s204, %s205
    %p214 = scmp.eq.s32.totalorder %s21, 0
    %p215 = por %p213, %p214
    %p216 = scmp.ne.s32.totalorder %s204, %s205
    %p217 = scmp.eq.s32.totalorder %s22, 1
    %p218 = por %p216, %p217
    %p220 = scmp.ne.s32.totalorder %s205, %s219
    %p221 = scmp.eq.s32.totalorder %s22, 0
    %p222 = por %p220, %p221
    %s224 = sadd.s32 %s223, 1
    %p227 = scmp.eq.s32.totalorder %s16, 1
    %p228 = scmp.ne.s32.totalorder %s223, %s225
    %p229 = scmp.eq.s32.totalorder %s16, 0
    %p230 = por %p228, %p229
    %p231 = scmp.ne.s32.totalorder %s223, %s225
    %p232 = scmp.eq.s32.totalorder %s21, 1
    %p233 = por %p231, %p232
    %p234 = scmp.ne.s32.totalorder %s225, %s226
    %p235 = scmp.eq.s32.totalorder %s21, 0
    %p236 = por %p234, %p235
    %p237 = scmp.ne.s32.totalorder %s225, %s226
    %p238 = scmp.eq.s32.totalorder %s22, 1
    %p239 = por %p237, %p238
    %p241 = scmp.ne.s32.totalorder %s226, %s240
    %p242 = scmp.eq.s32.totalorder %s22, 0
    %p243 = por %p241, %p242
    %s244 = ssub.s32 %s16, %s23
    %p245 = scmp.eq.s32.totalorder %s244, 0
    %s247 = sadd.s32 %s246, 1
    %s248 = scalar_select %p245, %s246, %s247
    %p251 = pneg %p245
    %p252 = scmp.eq.s32.totalorder %s16, 1
    %p253 = por %p251, %p252
    %p254 = scmp.ne.s32.totalorder %s246, %s249
    %p255 = scmp.eq.s32.totalorder %s16, 0
    %p256 = por %p254, %p255
    %p257 = scmp.ne.s32.totalorder %s246, %s249
    %p258 = scmp.eq.s32.totalorder %s21, 1
    %p259 = por %p257, %p258
    %p260 = scmp.ne.s32.totalorder %s249, %s250
    %p261 = scmp.eq.s32.totalorder %s21, 0
    %p262 = por %p260, %p261
    %p263 = scmp.ne.s32.totalorder %s249, %s250
    %p264 = scmp.eq.s32.totalorder %s22, 1
    %p265 = por %p263, %p264
    %p267 = scmp.ne.s32.totalorder %s250, %s266
    %p268 = scmp.eq.s32.totalorder %s22, 0
    %p269 = por %p267, %p268
    %p270 = scmp.le.s32.totalorder 1, %s16
    %p271 = scmp.lt.s32.totalorder %s16, 3
    %p272 = pnand %p270, %p271
    %p273 = pneg %p272
    // Predicated region
    $region9: #{up_forward.1} parent=5 // pred_check
      _
    $region10: #{up_forward.1} parent=5 // pred_check_branch
      %275 = sbr.rel (%p272) target = $region12
    $region11: #{up_forward.1} parent=5 // pred_region
      %s276 = ssub.s32 %s16, 1
      // Predicated region
      $region13: #{up_forward.1} parent=11 // pred_check
        %p277 = pneg %p89
      $region14: #{up_forward.1} parent=11 // pred_check_branch
        %279 = sbr.rel (%p277) target = $region16
      $region15: #{up_forward.1} parent=11 // pred_region
        _
      $region16: #{up_forward.1} parent=11 // pred_fallthru
        _
      // Predicated region
      $region17: #{up_forward.1} parent=11 // pred_check
        %p280 = pneg %p110
      $region18: #{up_forward.1} parent=11 // pred_check_branch
        %282 = sbr.rel (%p280) target = $region20
      $region19: #{up_forward.1} parent=11 // pred_region
        _
      $region20: #{up_forward.1} parent=11 // pred_fallthru
        _
      // Predicated region
      $region21: #{up_forward.1} parent=11 // pred_check
        %p283 = pneg %p131
      $region22: #{up_forward.1} parent=11 // pred_check_branch
        %285 = sbr.rel (%p283) target = $region24
      $region23: #{up_forward.1} parent=11 // pred_region
        _
      $region24: #{up_forward.1} parent=11 // pred_fallthru
        _
      // Predicated region
      $region25: #{up_forward.1} parent=11 // pred_check
        %p286 = pneg %p152
      $region26: #{up_forward.1} parent=11 // pred_check_branch
        %288 = sbr.rel (%p286) target = $region28
      $region27: #{up_forward.1} parent=11 // pred_region
        _
      $region28: #{up_forward.1} parent=11 // pred_fallthru
        _
      // Predicated region
      $region29: #{up_forward.1} parent=11 // pred_check
        %p289 = pneg %p173
      $region30: #{up_forward.1} parent=11 // pred_check_branch
        %291 = sbr.rel (%p289) target = $region32
      $region31: #{up_forward.1} parent=11 // pred_region
        _
      $region32: #{up_forward.1} parent=11 // pred_fallthru
        _
      // Predicated region
      $region33: #{up_forward.1} parent=11 // pred_check
        %p292 = pneg %p194
      $region34: #{up_forward.1} parent=11 // pred_check_branch
        %294 = sbr.rel (%p292) target = $region36
      $region35: #{up_forward.1} parent=11 // pred_region
        _
      $region36: #{up_forward.1} parent=11 // pred_fallthru
        _
      // Predicated region
      $region37: #{up_forward.1} parent=11 // pred_check
        %p295 = pneg %p215
      $region38: #{up_forward.1} parent=11 // pred_check_branch
        %297 = sbr.rel (%p295) target = $region40
      $region39: #{up_forward.1} parent=11 // pred_region
        _
      $region40: #{up_forward.1} parent=11 // pred_fallthru
        _
      // Predicated region
      $region41: #{up_forward.1} parent=11 // pred_check
        %p298 = pneg %p236
      $region42: #{up_forward.1} parent=11 // pred_check_branch
        %300 = sbr.rel (%p298) target = $region44
      $region43: #{up_forward.1} parent=11 // pred_region
        _
      $region44: #{up_forward.1} parent=11 // pred_fallthru
        _
    $region12: #{up_forward.1} parent=5 // pred_fallthru
      _
    %p301 = scmp.lt.s32.totalorder %s16, 2
    // Predicated region
    $region45: #{up_forward.1} parent=5 // pred_check
      %p302 = pneg %p301
    $region46: #{up_forward.1} parent=5 // pred_check_branch
      %304 = sbr.rel (%p302) target = $region48
    $region47: #{up_forward.1} parent=5 // pred_region
      // Predicated region
      $region49: #{up_forward.1} parent=47 // pred_check
        %p305 = pneg %p36
      $region50: #{up_forward.1} parent=47 // pred_check_branch
        %307 = sbr.rel (%p305) target = $region52
      $region51: #{up_forward.1} parent=47 // pred_region
        %p308 = scmp.lt.s32.totalorder %s16, 1
        %s309 = scalar_select %p308, %s16, 1
        %s310 = smul.addr %s309, 2
        %s311 = smul.addr %s310, 4
        %s312 = scalar_lea.vmem %s0, %s311
      $region52: #{up_forward.1} parent=47 // pred_fallthru
        _
      // Predicated region
      $region53: #{up_forward.1} parent=47 // pred_check
        %p313 = pneg %p62
      $region54: #{up_forward.1} parent=47 // pred_check_branch
        %315 = sbr.rel (%p313) target = $region56
      $region55: #{up_forward.1} parent=47 // pred_region
        %p316 = scmp.lt.s32.totalorder %s16, 1
        %s317 = scalar_select %p316, %s16, 1
        %s318 = smul.addr %s317, 4
        %s319 = scalar_lea.vmem %s1, %s318
      $region56: #{up_forward.1} parent=47 // pred_fallthru
        _
    $region48: #{up_forward.1} parent=5 // pred_fallthru
      _
    %p320 = scmp.le.s32.totalorder 1, %s16
    %p321 = scmp.lt.s32.totalorder %s16, 3
    %p322 = pnand %p320, %p321
    %p323 = pneg %p322
    // Predicated region
    $region57: #{up_forward.1} parent=5 // pred_check
      _
    $region58: #{up_forward.1} parent=5 // pred_check_branch
      %325 = sbr.rel (%p322) target = $region60
    $region59: #{up_forward.1} parent=5 // pred_region
      %s326 = ssub.s32 %s16, 1
      %p327 = scmp.lt.s32.totalorder %s21, 1
      %s328 = scalar_select %p327, %s21, 1
      %s329 = smul.addr %s328, 2
      %s330 = smul.addr %s329, 4
      %s331 = scalar_lea.vmem %s0, %s330
      %p332 = pneg %p42
      %p333 = pneg %p39
      %p334 = scmp.lt.s32.totalorder %s21, 1
      %s335 = scalar_select %p334, %s21, 1
      %s336 = smul.addr %s335, 4
      %s337 = scalar_lea.vmem %s1, %s336
      %p338 = pneg %p68
      %p339 = pneg %p65
      %p340 = pneg %p89
      %p341 = pneg %p86
      %p342 = pneg %p110
      %p343 = pneg %p107
      %p344 = pneg %p131
      %p345 = pneg %p128
      %p346 = pneg %p152
      %p347 = pneg %p149
      %p348 = pneg %p173
      %p349 = pneg %p170
      %p350 = pneg %p194
      %p351 = pneg %p191
      %p352 = pneg %p215
      %p353 = pneg %p212
      %p354 = pneg %p236
      %p355 = pneg %p233
      %p356 = pneg %p262
      %p357 = pneg %p259
      %p358 = scmp.lt.s32.totalorder %s21, 1
      %s359 = scalar_select %p358, %s21, 1
      %s360 = smul.addr %s359, 2
      %s361 = smul.addr %s360, 4
      %s362 = scalar_lea.vmem %s10, %s361
      %p363 = scmp.lt.s32.totalorder %s21, 1
      %s364 = scalar_select %p363, %s21, 1
      %s365 = smul.addr %s364, 2
      %s366 = smul.addr %s365, 4
      %s367 = scalar_lea.vmem %s0, %s366
      %p368 = scmp.lt.s32.totalorder %s21, 1
      %s369 = scalar_select %p368, %s21, 1
      %s370 = smul.addr %s369, 4
      %s371 = scalar_lea.vmem %s1, %s370
      %p372 = scmp.lt.s32.totalorder %s21, 1
      %s373 = scalar_select %p372, %s21, 1
      %s374 = smul.addr %s373, 2
      %s375 = smul.addr %s374, 4
      %s376 = scalar_lea.vmem %s10, %s375
      %v378 = vld [vmem:[%s371] sm:$0xf]
      %v379 = vld [vmem:[%s2] sm:$0xff]
      %v380 = vld [vmem:[%s2 + $0x8] sm:$0xff]
      %v381 = vld [vmem:[%s2 + $0x10] sm:$0xff]
      %v382 = vld [vmem:[%s2 + $0x18] sm:$0xff]
      %v383 = vld [vmem:[%s2 + $0x20] sm:$0xff]
      %v384 = vld [vmem:[%s2 + $0x28] sm:$0xff]
      %v385 = vld [vmem:[%s2 + $0x30] sm:$0xff]
      %v386 = vld [vmem:[%s2 + $0x38] sm:$0xff]
      %v387 = vld [vmem:[%s2 + $0x40] sm:$0xff]
      %v388 = vld [vmem:[%s2 + $0x48] sm:$0xff]
      %v389 = vld [vmem:[%s2 + $0x50] sm:$0xff]
      %v390 = vld [vmem:[%s2 + $0x58] sm:$0xff]
      %v391 = vld [vmem:[%s2 + $0x60] sm:$0xff]
      %v392 = vld [vmem:[%s2 + $0x68] sm:$0xff]
      %v393 = vld [vmem:[%s2 + $0x70] sm:$0xff]
      %v394 = vld [vmem:[%s2 + $0x78] sm:$0xff]
      %vm395 = vcmask 523264
      %v397 = vsel %vm395, %v378, 0
      %399 = vmatprep.subr.mxu0 %v380
      %400 = vmatpush1.msra.mxu0 %v379
      %401 = vmatprep.subr.mxu0 %v382
      %402 = vmatpush1.msra.mxu0 %v381
      %403 = vmatprep.subr.mxu0 %v384
      %404 = vmatpush1.msra.mxu0 %v383
      %405 = vmatprep.subr.mxu0 %v386
      %406 = vmatpush1.msra.mxu0 %v385
      %407 = vmatprep.subr.mxu0 %v388
      %408 = vmatpush1.msra.mxu0 %v387
      %409 = vmatprep.subr.mxu0 %v390
      %410 = vmatpush1.msra.mxu0 %v389
      %411 = vmatprep.subr.mxu0 %v392
      %412 = vmatpush1.msra.mxu0 %v391
      %413 = vmatprep.subr.mxu0 %v394
      %414 = vmatpush1.msra.mxu0 %v393
      %415 = vmatprep.subr.mxu0 0.0
      %416 = vmatpush1.msra.mxu0 0.0
      %417 = vmatprep.subr.mxu0 0.0
      %418 = vmatpush1.msra.mxu0 0.0
      %419 = vmatprep.subr.mxu0 0.0
      %420 = vmatpush1.msra.mxu0 0.0
      %421 = vmatprep.subr.mxu0 0.0
      %422 = vmatpush1.msra.mxu0 0.0
      %423 = vmatprep.subr.mxu0 0.0
      %424 = vmatpush1.msra.mxu0 0.0
      %425 = vmatprep.subr.mxu0 0.0
      %426 = vmatpush1.msra.mxu0 0.0
      %427 = vmatprep.subr.mxu0 0.0
      %428 = vmatpush1.msra.mxu0 0.0
      %429 = vmatprep.subr.mxu0 0.0
      %430 = vmatpush1.msra.mxu0 0.0
      %431 = vmatprep.subr.mxu0 0.0
      %432 = vmatpush1.msra.mxu0 0.0
      %433 = vmatprep.subr.mxu0 0.0
      %434 = vmatpush1.msra.mxu0 0.0
      %435 = vmatprep.subr.mxu0 0.0
      %436 = vmatpush1.msra.mxu0 0.0
      %437 = vmatprep.subr.mxu0 0.0
      %438 = vmatpush1.msra.mxu0 0.0
      %439 = vmatprep.subr.mxu0 0.0
      %440 = vmatpush1.msra.mxu0 0.0
      %441 = vmatprep.subr.mxu0 0.0
      %442 = vmatpush1.msra.mxu0 0.0
      %443 = vmatprep.subr.mxu0 0.0
      %444 = vmatpush1.msra.mxu0 0.0
      %445 = vmatprep.subr.mxu0 0.0
      %446 = vmatpush1.msra.mxu0 0.0
      %447 = vmatprep.subr.mxu0 0.0
      %448 = vmatpush1.msra.mxu0 0.0
      %449 = vmatprep.subr.mxu0 0.0
      %450 = vmatpush1.msra.mxu0 0.0
      %451 = vmatprep.subr.mxu0 0.0
      %452 = vmatpush1.msra.mxu0 0.0
      %453 = vmatprep.subr.mxu0 0.0
      %454 = vmatpush1.msra.mxu0 0.0
      %455 = vmatprep.subr.mxu0 0.0
      %456 = vmatpush1.msra.mxu0 0.0
      %457 = vmatprep.subr.mxu0 0.0
      %458 = vmatpush1.msra.mxu0 0.0
      %459 = vmatprep.subr.mxu0 0.0
      %460 = vmatpush1.msra.mxu0 0.0
      %461 = vmatprep.subr.mxu0 0.0
      %462 = vmatpush1.msra.mxu0 0.0
      %463 = vmatprep.mubr.f32.mxu0 0.0
      %464 = vmatmul.mubr.f32.gmra.mrb[0].mxu0 %v397
      %v465 = vpop.f32.mrb[0].mxu0
      %v466 = vadd.f32 0.0, %v465
      %v467 = vpop.f32.mrb[0].mxu0
      %v468 = vadd.f32 0.0, %v467
      %469 = vdwg.mxu0
      %v470 = vld [vmem:[%s367] sm:$0xff]
      %v472 = vcombine.high %v470, %v470
      %474 = vst [vmem:[#allocation2] sm:$0xf] %v470
      %475 = vst [vmem:[#allocation2 + $0x8] sm:$0xf] %v472
      %v478 = vrot.slane %v466, 4
      %v479 = vrot.slane %v468, 4
      %482 = vst [vmem:[#allocation2] sm:$0xf0] %v478
      %483 = vst [vmem:[#allocation2 + $0x8] sm:$0xf0] %v479
      %v484 = vld [vmem:[#allocation2] sm:$0xff]
      %v485 = vld [vmem:[#allocation2 + $0x8] sm:$0xff]
      %v486 = vld [vmem:[%s3] sm:$0xff]
      %v487 = vld [vmem:[%s3 + $0x8] sm:$0xff]
      %v488 = vld [vmem:[%s3 + $0x10] sm:$0x1]
      %v489 = vld [vmem:[%s3 + $0x18] sm:$0x1]
      %v490 = vld [vmem:[%s4] sm:$0x3]
      %v491 = vld [vmem:[%s4 + $0x2] sm:$0x3]
      %v492 = vld [vmem:[%s4 + $0x4] sm:$0x3]
      %v493 = vld [vmem:[%s4 + $0x6] sm:$0x3]
      %v494 = vld [vmem:[%s4 + $0x8] sm:$0x3]
      %v495 = vld [vmem:[%s4 + $0xa] sm:$0x3]
      %v496 = vld [vmem:[%s4 + $0xc] sm:$0x3]
      %v497 = vld [vmem:[%s4 + $0xe] sm:$0x3]
      %v498 = vld [vmem:[%s4 + $0x10] sm:$0x3]
      %v499 = vld [vmem:[%s7] sm:$0x3]
      %v500 = vld [vmem:[%s7 + $0x2] sm:$0x3]
      %v501 = vld [vmem:[%s7 + $0x4] sm:$0x3]
      %v502 = vld [vmem:[%s7 + $0x6] sm:$0x3]
      %v503 = vld [vmem:[%s7 + $0x8] sm:$0x3]
      %v504 = vld [vmem:[%s7 + $0xa] sm:$0x3]
      %v505 = vld [vmem:[%s7 + $0xc] sm:$0x3]
      %v506 = vld [vmem:[%s7 + $0xe] sm:$0x3]
      %v507 = vld [vmem:[%s7 + $0x10] sm:$0x3]
      %508 = vrot.lane.b32.xlu0 %v484, 17
      %v509 = vpop.permute.xlu0 %508
      %510 = vrot.lane.b32.xlu0 %v485, 17
      %v511 = vpop.permute.xlu0 %510
      %v512 = vlaneseq
      %v513 = vand.u32 %v512, 127
      %vm514 = vcmp.lt.s32.totalorder %v513, 17
      %v515 = vsel %vm514, %v509, %v511
      %v516 = vsel %vm514, %v511, %v509
      %v517 = vlaneseq
      %v518 = vshrl.u32 %v517, 7
      %v519 = vsub.s32 0, %v518
      %v520 = vrot.slane %v486, %v519
      %v521 = vlaneseq
      %v522 = vshrl.u32 %v521, 7
      %v523 = vsub.s32 0, %v522
      %v524 = vrot.slane %v487, %v523
      %v525 = vmul.f32 %v516, %v520
      %v526 = vmul.f32 %v515, %v524
      %v527 = vpack.c.bf16 %v525, %v525
      %v528 = vpack.c.bf16 %v526, %v526
      %529 = vrot.lane.b32.xlu0 %v484, 16
      %v530 = vpop.permute.xlu0 %529
      %531 = vrot.lane.b32.xlu0 %v485, 16
      %v532 = vpop.permute.xlu0 %531
      %vm533 = vcmp.lt.s32.totalorder %v513, 16
      %v534 = vsel %vm533, %v530, %v532
      %v535 = vsel %vm533, %v532, %v530
      %v536 = vlaneseq
      %v537 = vshrl.u32 %v536, 7
      %v538 = vsub.s32 1, %v537
      %v539 = vrot.slane %v486, %v538
      %v540 = vlaneseq
      %v541 = vshrl.u32 %v540, 7
      %v542 = vsub.s32 1, %v541
      %v543 = vrot.slane %v487, %v542
      %v544 = vmul.f32 %v535, %v539
      %v545 = vmul.f32 %v534, %v543
      %v546 = vpack.c.bf16 %v544, %v544
      %v547 = vpack.c.bf16 %v545, %v545
      %vm548 = vcmask 64512
      %v550 = vsel %vm548, %v491, 0
      %vm552 = vcmask 1043456
      %v554 = vsel %vm552, %v546, 0
      %v557 = vsel %vm552, %v547, 0
      %559 = vmatprep.subr.bf16.mxu0 %v557
      %560 = vmatpush1.bf16.msra.mxu0 %v554
      %561 = vmatprep.subr.bf16.mxu0 0
      %562 = vmatpush1.bf16.msra.mxu0 0
      %563 = vmatprep.subr.bf16.mxu0 0
      %564 = vmatpush1.bf16.msra.mxu0 0
      %565 = vmatprep.subr.bf16.mxu0 0
      %566 = vmatpush1.bf16.msra.mxu0 0
      %567 = vmatprep.subr.bf16.mxu0 0
      %568 = vmatpush1.bf16.msra.mxu0 0
      %569 = vmatprep.subr.bf16.mxu0 0
      %570 = vmatpush1.bf16.msra.mxu0 0
      %571 = vmatprep.subr.bf16.mxu0 0
      %572 = vmatpush1.bf16.msra.mxu0 0
      %573 = vmatprep.subr.bf16.mxu0 0
      %574 = vmatpush1.bf16.msra.mxu0 0
      %575 = vmatprep.subr.bf16.mxu0 0
      %576 = vmatpush1.bf16.msra.mxu0 0
      %577 = vmatprep.subr.bf16.mxu0 0
      %578 = vmatpush1.bf16.msra.mxu0 0
      %579 = vmatprep.subr.bf16.mxu0 0
      %580 = vmatpush1.bf16.msra.mxu0 0
      %581 = vmatprep.subr.bf16.mxu0 0
      %582 = vmatpush1.bf16.msra.mxu0 0
      %583 = vmatprep.subr.bf16.mxu0 0
      %584 = vmatpush1.bf16.msra.mxu0 0
      %585 = vmatprep.subr.bf16.mxu0 0
      %586 = vmatpush1.bf16.msra.mxu0 0
      %587 = vmatprep.subr.bf16.mxu0 0
      %588 = vmatpush1.bf16.msra.mxu0 0
      %589 = vmatprep.subr.bf16.mxu0 0
      %590 = vmatpush1.bf16.msra.mxu0 0
      %591 = vmatprep.mubr.bf16.mxu0 0
      %592 = vmatmul.mubr.bf16.gmra.mrb[0].mxu0 %v550
      %v593 = vpop.f32.mrb[0].mxu0
      %v594 = vadd.f32 0.0, %v593
      %v595 = vpop.f32.mrb[0].mxu0
      %v596 = vadd.f32 0.0, %v595
      %v597 = vpop.f32.mrb[0].mxu0
      %v598 = vpop.f32.mrb[0].mxu0
      %599 = vdwg.mxu0
      %v601 = vsel %vm548, %v490, 0
      %v604 = vsel %vm552, %v527, 0
      %v607 = vsel %vm552, %v528, 0
      %609 = vmatprep.subr.bf16.mxu0 %v607
      %610 = vmatpush1.bf16.msra.mxu0 %v604
      %611 = vmatprep.subr.bf16.mxu0 0
      %612 = vmatpush1.bf16.msra.mxu0 0
      %613 = vmatprep.subr.bf16.mxu0 0
      %614 = vmatpush1.bf16.msra.mxu0 0
      %615 = vmatprep.subr.bf16.mxu0 0
      %616 = vmatpush1.bf16.msra.mxu0 0
      %617 = vmatprep.subr.bf16.mxu0 0
      %618 = vmatpush1.bf16.msra.mxu0 0
      %619 = vmatprep.subr.bf16.mxu0 0
      %620 = vmatpush1.bf16.msra.mxu0 0
      %621 = vmatprep.subr.bf16.mxu0 0
      %622 = vmatpush1.bf16.msra.mxu0 0
      %623 = vmatprep.subr.bf16.mxu0 0
      %624 = vmatpush1.bf16.msra.mxu0 0
      %625 = vmatprep.subr.bf16.mxu0 0
      %626 = vmatpush1.bf16.msra.mxu0 0
      %627 = vmatprep.subr.bf16.mxu0 0
      %628 = vmatpush1.bf16.msra.mxu0 0
      %629 = vmatprep.subr.bf16.mxu0 0
      %630 = vmatpush1.bf16.msra.mxu0 0
      %631 = vmatprep.subr.bf16.mxu0 0
      %632 = vmatpush1.bf16.msra.mxu0 0
      %633 = vmatprep.subr.bf16.mxu0 0
      %634 = vmatpush1.bf16.msra.mxu0 0
      %635 = vmatprep.subr.bf16.mxu0 0
      %636 = vmatpush1.bf16.msra.mxu0 0
      %637 = vmatprep.subr.bf16.mxu0 0
      %638 = vmatpush1.bf16.msra.mxu0 0
      %639 = vmatprep.subr.bf16.mxu0 0
      %640 = vmatpush1.bf16.msra.mxu0 0
      %641 = vmatprep.mubr.bf16.mxu0 0
      %642 = vmatmul.mubr.bf16.gmra.mrb[0].mxu0 %v601
      %v643 = vpop.f32.mrb[0].mxu0
      %v644 = vadd.f32 %v594, %v643
      %v645 = vpop.f32.mrb[0].mxu0
      %v646 = vadd.f32 %v596, %v645
      %v647 = vpop.f32.mrb[0].mxu0
      %v648 = vpop.f32.mrb[0].mxu0
      %649 = vdwg.mxu0
      %650 = vrot.lane.b32.xlu0 %v484, 15
      %v651 = vpop.permute.xlu0 %650
      %652 = vrot.lane.b32.xlu0 %v485, 15
      %v653 = vpop.permute.xlu0 %652
      %vm654 = vcmp.lt.s32.totalorder %v513, 15
      %v655 = vsel %vm654, %v651, %v653
      %v656 = vsel %vm654, %v653, %v651
      %v657 = vlaneseq
      %v658 = vshrl.u32 %v657, 7
      %v659 = vsub.s32 2, %v658
      %v660 = vrot.slane %v486, %v659
      %v661 = vlaneseq
      %v662 = vshrl.u32 %v661, 7
      %v663 = vsub.s32 2, %v662
      %v664 = vrot.slane %v487, %v663
      %v665 = vmul.f32 %v656, %v660
      %v666 = vmul.f32 %v655, %v664
      %v667 = vpack.c.bf16 %v665, %v665
      %v668 = vpack.c.bf16 %v666, %v666
      %v670 = vsel %vm548, %v492, 0
      %v673 = vsel %vm552, %v667, 0
      %v676 = vsel %vm552, %v668, 0
      %678 = vmatprep.subr.bf16.mxu0 %v676
      %679 = vmatpush1.bf16.msra.mxu0 %v673
      %680 = vmatprep.subr.bf16.mxu0 0
      %681 = vmatpush1.bf16.msra.mxu0 0
      %682 = vmatprep.subr.bf16.mxu0 0
      %683 = vmatpush1.bf16.msra.mxu0 0
      %684 = vmatprep.subr.bf16.mxu0 0
      %685 = vmatpush1.bf16.msra.mxu0 0
      %686 = vmatprep.subr.bf16.mxu0 0
      %687 = vmatpush1.bf16.msra.mxu0 0
      %688 = vmatprep.subr.bf16.mxu0 0
      %689 = vmatpush1.bf16.msra.mxu0 0
      %690 = vmatprep.subr.bf16.mxu0 0
      %691 = vmatpush1.bf16.msra.mxu0 0
      %692 = vmatprep.subr.bf16.mxu0 0
      %693 = vmatpush1.bf16.msra.mxu0 0
      %694 = vmatprep.subr.bf16.mxu0 0
      %695 = vmatpush1.bf16.msra.mxu0 0
      %696 = vmatprep.subr.bf16.mxu0 0
      %697 = vmatpush1.bf16.msra.mxu0 0
      %698 = vmatprep.subr.bf16.mxu0 0
      %699 = vmatpush1.bf16.msra.mxu0 0
      %700 = vmatprep.subr.bf16.mxu0 0
      %701 = vmatpush1.bf16.msra.mxu0 0
      %702 = vmatprep.subr.bf16.mxu0 0
      %703 = vmatpush1.bf16.msra.mxu0 0
      %704 = vmatprep.subr.bf16.mxu0 0
      %705 = vmatpush1.bf16.msra.mxu0 0
      %706 = vmatprep.subr.bf16.mxu0 0
      %707 = vmatpush1.bf16.msra.mxu0 0
      %708 = vmatprep.subr.bf16.mxu0 0
      %709 = vmatpush1.bf16.msra.mxu0 0
      %710 = vmatprep.mubr.bf16.mxu0 0
      %711 = vmatmul.mubr.bf16.gmra.mrb[0].mxu0 %v670
      %v712 = vpop.f32.mrb[0].mxu0
      %v713 = vadd.f32 0.0, %v712
      %v714 = vpop.f32.mrb[0].mxu0
      %v715 = vadd.f32 0.0, %v714
      %v716 = vpop.f32.mrb[0].mxu0
      %v717 = vpop.f32.mrb[0].mxu0
      %718 = vdwg.mxu0
      %v719 = vadd.f32 %v644, %v713
      %v720 = vadd.f32 %v646, %v715
      %721 = vrot.lane.b32.xlu0 %v484, 1
      %v722 = vpop.permute.xlu0 %721
      %723 = vrot.lane.b32.xlu0 %v485, 1
      %v724 = vpop.permute.xlu0 %723
      %vm725 = vcmp.lt.s32.totalorder %v513, 1
      %v726 = vsel %vm725, %v722, %v724
      %v727 = vsel %vm725, %v724, %v722
      %v728 = vlaneseq
      %v729 = vshrl.u32 %v728, 7
      %v730 = vsub.s32 3, %v729
      %v731 = vrot.slane %v486, %v730
      %v732 = vlaneseq
      %v733 = vshrl.u32 %v732, 7
      %v734 = vsub.s32 3, %v733
      %v735 = vrot.slane %v487, %v734
      %v736 = vmul.f32 %v727, %v731
      %v737 = vmul.f32 %v726, %v735
      %v738 = vpack.c.bf16 %v736, %v736
      %v739 = vpack.c.bf16 %v737, %v737
      %v741 = vsel %vm548, %v493, 0
      %v744 = vsel %vm552, %v738, 0
      %v747 = vsel %vm552, %v739, 0
      %749 = vmatprep.subr.bf16.mxu0 %v747
      %750 = vmatpush1.bf16.msra.mxu0 %v744
      %751 = vmatprep.subr.bf16.mxu0 0
      %752 = vmatpush1.bf16.msra.mxu0 0
      %753 = vmatprep.subr.bf16.mxu0 0
      %754 = vmatpush1.bf16.msra.mxu0 0
      %755 = vmatprep.subr.bf16.mxu0 0
      %756 = vmatpush1.bf16.msra.mxu0 0
      %757 = vmatprep.subr.bf16.mxu0 0
      %758 = vmatpush1.bf16.msra.mxu0 0
      %759 = vmatprep.subr.bf16.mxu0 0
      %760 = vmatpush1.bf16.msra.mxu0 0
      %761 = vmatprep.subr.bf16.mxu0 0
      %762 = vmatpush1.bf16.msra.mxu0 0
      %763 = vmatprep.subr.bf16.mxu0 0
      %764 = vmatpush1.bf16.msra.mxu0 0
      %765 = vmatprep.subr.bf16.mxu0 0
      %766 = vmatpush1.bf16.msra.mxu0 0
      %767 = vmatprep.subr.bf16.mxu0 0
      %768 = vmatpush1.bf16.msra.mxu0 0
      %769 = vmatprep.subr.bf16.mxu0 0
      %770 = vmatpush1.bf16.msra.mxu0 0
      %771 = vmatprep.subr.bf16.mxu0 0
      %772 = vmatpush1.bf16.msra.mxu0 0
      %773 = vmatprep.subr.bf16.mxu0 0
      %774 = vmatpush1.bf16.msra.mxu0 0
      %775 = vmatprep.subr.bf16.mxu0 0
      %776 = vmatpush1.bf16.msra.mxu0 0
      %777 = vmatprep.subr.bf16.mxu0 0
      %778 = vmatpush1.bf16.msra.mxu0 0
      %779 = vmatprep.subr.bf16.mxu0 0
      %780 = vmatpush1.bf16.msra.mxu0 0
      %781 = vmatprep.mubr.bf16.mxu0 0
      %782 = vmatmul.mubr.bf16.gmra.mrb[0].mxu0 %v741
      %v783 = vpop.f32.mrb[0].mxu0
      %v784 = vadd.f32 0.0, %v783
      %v785 = vpop.f32.mrb[0].mxu0
      %v786 = vadd.f32 0.0, %v785
      %v787 = vpop.f32.mrb[0].mxu0
      %v788 = vpop.f32.mrb[0].mxu0
      %789 = vdwg.mxu0
      %v790 = vadd.f32 %v719, %v784
      %v791 = vadd.f32 %v720, %v786
      %v792 = vpack.c.bf16 %v484, %v484
      %v793 = vpack.c.bf16 %v485, %v485
      %v795 = vsel %vm548, %v494, 0
      %v798 = vsel %vm552, %v792, 0
      %v801 = vsel %vm552, %v793, 0
      %803 = vmatprep.subr.bf16.mxu0 %v801
      %804 = vmatpush1.bf16.msra.mxu0 %v798
      %805 = vmatprep.subr.bf16.mxu0 0
      %806 = vmatpush1.bf16.msra.mxu0 0
      %807 = vmatprep.subr.bf16.mxu0 0
      %808 = vmatpush1.bf16.msra.mxu0 0
      %809 = vmatprep.subr.bf16.mxu0 0
      %810 = vmatpush1.bf16.msra.mxu0 0
      %811 = vmatprep.subr.bf16.mxu0 0
      %812 = vmatpush1.bf16.msra.mxu0 0
      %813 = vmatprep.subr.bf16.mxu0 0
      %814 = vmatpush1.bf16.msra.mxu0 0
      %815 = vmatprep.subr.bf16.mxu0 0
      %816 = vmatpush1.bf16.msra.mxu0 0
      %817 = vmatprep.subr.bf16.mxu0 0
      %818 = vmatpush1.bf16.msra.mxu0 0
      %819 = vmatprep.subr.bf16.mxu0 0
      %820 = vmatpush1.bf16.msra.mxu0 0
      %821 = vmatprep.subr.bf16.mxu0 0
      %822 = vmatpush1.bf16.msra.mxu0 0
      %823 = vmatprep.subr.bf16.mxu0 0
      %824 = vmatpush1.bf16.msra.mxu0 0
      %825 = vmatprep.subr.bf16.mxu0 0
      %826 = vmatpush1.bf16.msra.mxu0 0
      %827 = vmatprep.subr.bf16.mxu0 0
      %828 = vmatpush1.bf16.msra.mxu0 0
      %829 = vmatprep.subr.bf16.mxu0 0
      %830 = vmatpush1.bf16.msra.mxu0 0
      %831 = vmatprep.subr.bf16.mxu0 0
      %832 = vmatpush1.bf16.msra.mxu0 0
      %833 = vmatprep.subr.bf16.mxu0 0
      %834 = vmatpush1.bf16.msra.mxu0 0
      %835 = vmatprep.mubr.bf16.mxu0 0
      %836 = vmatmul.mubr.bf16.gmra.mrb[0].mxu0 %v795
      %v837 = vpop.f32.mrb[0].mxu0
      %v838 = vadd.f32 0.0, %v837
      %v839 = vpop.f32.mrb[0].mxu0
      %v840 = vadd.f32 0.0, %v839
      %v841 = vpop.f32.mrb[0].mxu0
      %v842 = vpop.f32.mrb[0].mxu0
      %843 = vdwg.mxu0
      %v844 = vadd.f32 %v790, %v838
      %v845 = vadd.f32 %v791, %v840
      %846 = vrot.lane.b32.xlu0 %v484, 127
      %v847 = vpop.permute.xlu0 %846
      %848 = vrot.lane.b32.xlu0 %v485, 127
      %v849 = vpop.permute.xlu0 %848
      %vm850 = vcmp.lt.s32.totalorder %v513, 127
      %v851 = vsel %vm850, %v847, %v849
      %v852 = vsel %vm850, %v849, %v847
      %v853 = vlaneseq
      %v854 = vshrl.u32 %v853, 7
      %v855 = vsub.s32 5, %v854
      %v856 = vrot.slane %v486, %v855
      %v857 = vlaneseq
      %v858 = vshrl.u32 %v857, 7
      %v859 = vsub.s32 5, %v858
      %v860 = vrot.slane %v487, %v859
      %v861 = vmul.f32 %v851, %v856
      %v862 = vmul.f32 %v852, %v860
      %v863 = vpack.c.bf16 %v861, %v861
      %v864 = vpack.c.bf16 %v862, %v862
      %v866 = vsel %vm548, %v495, 0
      %v869 = vsel %vm552, %v863, 0
      %v872 = vsel %vm552, %v864, 0
      %874 = vmatprep.subr.bf16.mxu0 %v872
      %875 = vmatpush1.bf16.msra.mxu0 %v869
      %876 = vmatprep.subr.bf16.mxu0 0
      %877 = vmatpush1.bf16.msra.mxu0 0
      %878 = vmatprep.subr.bf16.mxu0 0
      %879 = vmatpush1.bf16.msra.mxu0 0
      %880 = vmatprep.subr.bf16.mxu0 0
      %881 = vmatpush1.bf16.msra.mxu0 0
      %882 = vmatprep.subr.bf16.mxu0 0
      %883 = vmatpush1.bf16.msra.mxu0 0
      %884 = vmatprep.subr.bf16.mxu0 0
      %885 = vmatpush1.bf16.msra.mxu0 0
      %886 = vmatprep.subr.bf16.mxu0 0
      %887 = vmatpush1.bf16.msra.mxu0 0
      %888 = vmatprep.subr.bf16.mxu0 0
      %889 = vmatpush1.bf16.msra.mxu0 0
      %890 = vmatprep.subr.bf16.mxu0 0
      %891 = vmatpush1.bf16.msra.mxu0 0
      %892 = vmatprep.subr.bf16.mxu0 0
      %893 = vmatpush1.bf16.msra.mxu0 0
      %894 = vmatprep.subr.bf16.mxu0 0
      %895 = vmatpush1.bf16.msra.mxu0 0
      %896 = vmatprep.subr.bf16.mxu0 0
      %897 = vmatpush1.bf16.msra.mxu0 0
      %898 = vmatprep.subr.bf16.mxu0 0
      %899 = vmatpush1.bf16.msra.mxu0 0
      %900 = vmatprep.subr.bf16.mxu0 0
      %901 = vmatpush1.bf16.msra.mxu0 0
      %902 = vmatprep.subr.bf16.mxu0 0
      %903 = vmatpush1.bf16.msra.mxu0 0
      %904 = vmatprep.subr.bf16.mxu0 0
      %905 = vmatpush1.bf16.msra.mxu0 0
      %906 = vmatprep.mubr.bf16.mxu0 0
      %907 = vmatmul.mubr.bf16.gmra.mrb[0].mxu0 %v866
      %v908 = vpop.f32.mrb[0].mxu0
      %v909 = vadd.f32 0.0, %v908
      %v910 = vpop.f32.mrb[0].mxu0
      %v911 = vadd.f32 0.0, %v910
      %v912 = vpop.f32.mrb[0].mxu0
      %v913 = vpop.f32.mrb[0].mxu0
      %914 = vdwg.mxu0
      %v915 = vadd.f32 %v844, %v909
      %v916 = vadd.f32 %v845, %v911
      %917 = vrot.lane.b32.xlu0 %v484, 113
      %v918 = vpop.permute.xlu0 %917
      %919 = vrot.lane.b32.xlu0 %v485, 113
      %v920 = vpop.permute.xlu0 %919
      %vm921 = vcmp.lt.s32.totalorder %v513, 113
      %v922 = vsel %vm921, %v918, %v920
      %v923 = vsel %vm921, %v920, %v918
      %v924 = vlaneseq
      %v925 = vshrl.u32 %v924, 7
      %v926 = vsub.s32 6, %v925
      %v927 = vrot.slane %v486, %v926
      %v928 = vlaneseq
      %v929 = vshrl.u32 %v928, 7
      %v930 = vsub.s32 6, %v929
      %v931 = vrot.slane %v487, %v930
      %v932 = vmul.f32 %v922, %v927
      %v933 = vmul.f32 %v923, %v931
      %v934 = vpack.c.bf16 %v932, %v932
      %v935 = vpack.c.bf16 %v933, %v933
      %v937 = vsel %vm548, %v496, 0
      %v940 = vsel %vm552, %v934, 0
      %v943 = vsel %vm552, %v935, 0
      %945 = vmatprep.subr.bf16.mxu0 %v943
      %946 = vmatpush1.bf16.msra.mxu0 %v940
      %947 = vmatprep.subr.bf16.mxu0 0
      %948 = vmatpush1.bf16.msra.mxu0 0
      %949 = vmatprep.subr.bf16.mxu0 0
      %950 = vmatpush1.bf16.msra.mxu0 0
      %951 = vmatprep.subr.bf16.mxu0 0
      %952 = vmatpush1.bf16.msra.mxu0 0
      %953 = vmatprep.subr.bf16.mxu0 0
      %954 = vmatpush1.bf16.msra.mxu0 0
      %955 = vmatprep.subr.bf16.mxu0 0
      %956 = vmatpush1.bf16.msra.mxu0 0
      %957 = vmatprep.subr.bf16.mxu0 0
      %958 = vmatpush1.bf16.msra.mxu0 0
      %959 = vmatprep.subr.bf16.mxu0 0
      %960 = vmatpush1.bf16.msra.mxu0 0
      %961 = vmatprep.subr.bf16.mxu0 0
      %962 = vmatpush1.bf16.msra.mxu0 0
      %963 = vmatprep.subr.bf16.mxu0 0
      %964 = vmatpush1.bf16.msra.mxu0 0
      %965 = vmatprep.subr.bf16.mxu0 0
      %966 = vmatpush1.bf16.msra.mxu0 0
      %967 = vmatprep.subr.bf16.mxu0 0
      %968 = vmatpush1.bf16.msra.mxu0 0
      %969 = vmatprep.subr.bf16.mxu0 0
      %970 = vmatpush1.bf16.msra.mxu0 0
      %971 = vmatprep.subr.bf16.mxu0 0
      %972 = vmatpush1.bf16.msra.mxu0 0
      %973 = vmatprep.subr.bf16.mxu0 0
      %974 = vmatpush1.bf16.msra.mxu0 0
      %975 = vmatprep.subr.bf16.mxu0 0
      %976 = vmatpush1.bf16.msra.mxu0 0
      %977 = vmatprep.mubr.bf16.mxu0 0
      %978 = vmatmul.mubr.bf16.gmra.mrb[0].mxu0 %v937
      %v979 = vpop.f32.mrb[0].mxu0
      %v980 = vadd.f32 0.0, %v979
      %v981 = vpop.f32.mrb[0].mxu0
      %v982 = vadd.f32 0.0, %v981
      %v983 = vpop.f32.mrb[0].mxu0
      %v984 = vpop.f32.mrb[0].mxu0
      %985 = vdwg.mxu0
      %v986 = vadd.f32 %v915, %v980
      %v987 = vadd.f32 %v916, %v982
      %988 = vrot.lane.b32.xlu0 %v484, 112
      %v989 = vpop.permute.xlu0 %988
      %990 = vrot.lane.b32.xlu0 %v485, 112
      %v991 = vpop.permute.xlu0 %990
      %vm992 = vcmp.lt.s32.totalorder %v513, 112
      %v993 = vsel %vm992, %v989, %v991
      %v994 = vsel %vm992, %v991, %v989
      %v995 = vlaneseq
      %v996 = vshrl.u32 %v995, 7
      %v997 = vsub.s32 7, %v996
      %v998 = vrot.slane %v486, %v997
      %v999 = vlaneseq
      %v1000 = vshrl.u32 %v999, 7
      %v1001 = vsub.s32 7, %v1000
      %v1002 = vrot.slane %v487, %v1001
      %v1003 = vmul.f32 %v993, %v998
      %v1004 = vmul.f32 %v994, %v1002
      %v1005 = vpack.c.bf16 %v1003, %v1003
      %v1006 = vpack.c.bf16 %v1004, %v1004
      %v1008 = vsel %vm548, %v497, 0
      %v1011 = vsel %vm552, %v1005, 0
      %v1014 = vsel %vm552, %v1006, 0
      %1016 = vmatprep.subr.bf16.mxu0 %v1014
      %1017 = vmatpush1.bf16.msra.mxu0 %v1011
      %1018 = vmatprep.subr.bf16.mxu0 0
      %1019 = vmatpush1.bf16.msra.mxu0 0
      %1020 = vmatprep.subr.bf16.mxu0 0
      %1021 = vmatpush1.bf16.msra.mxu0 0
      %1022 = vmatprep.subr.bf16.mxu0 0
      %1023 = vmatpush1.bf16.msra.mxu0 0
      %1024 = vmatprep.subr.bf16.mxu0 0
      %1025 = vmatpush1.bf16.msra.mxu0 0
      %1026 = vmatprep.subr.bf16.mxu0 0
      %1027 = vmatpush1.bf16.msra.mxu0 0
      %1028 = vmatprep.subr.bf16.mxu0 0
      %1029 = vmatpush1.bf16.msra.mxu0 0
      %1030 = vmatprep.subr.bf16.mxu0 0
      %1031 = vmatpush1.bf16.msra.mxu0 0
      %1032 = vmatprep.subr.bf16.mxu0 0
      %1033 = vmatpush1.bf16.msra.mxu0 0
      %1034 = vmatprep.subr.bf16.mxu0 0
      %1035 = vmatpush1.bf16.msra.mxu0 0
      %1036 = vmatprep.subr.bf16.mxu0 0
      %1037 = vmatpush1.bf16.msra.mxu0 0
      %1038 = vmatprep.subr.bf16.mxu0 0
      %1039 = vmatpush1.bf16.msra.mxu0 0
      %1040 = vmatprep.subr.bf16.mxu0 0
      %1041 = vmatpush1.bf16.msra.mxu0 0
      %1042 = vmatprep.subr.bf16.mxu0 0
      %1043 = vmatpush1.bf16.msra.mxu0 0
      %1044 = vmatprep.subr.bf16.mxu0 0
      %1045 = vmatpush1.bf16.msra.mxu0 0
      %1046 = vmatprep.subr.bf16.mxu0 0
      %1047 = vmatpush1.bf16.msra.mxu0 0
      %1048 = vmatprep.mubr.bf16.mxu0 0
      %1049 = vmatmul.mubr.bf16.gmra.mrb[0].mxu0 %v1008
      %v1050 = vpop.f32.mrb[0].mxu0
      %v1051 = vadd.f32 0.0, %v1050
      %v1052 = vpop.f32.mrb[0].mxu0
      %v1053 = vadd.f32 0.0, %v1052
      %v1054 = vpop.f32.mrb[0].mxu0
      %v1055 = vpop.f32.mrb[0].mxu0
      %1056 = vdwg.mxu0
      %v1057 = vadd.f32 %v986, %v1051
      %v1058 = vadd.f32 %v987, %v1053
      %1059 = vrot.lane.b32.xlu0 %v484, 111
      %v1060 = vpop.permute.xlu0 %1059
      %1061 = vrot.lane.b32.xlu0 %v485, 111
      %v1062 = vpop.permute.xlu0 %1061
      %vm1063 = vcmp.lt.s32.totalorder %v513, 111
      %v1064 = vsel %vm1063, %v1060, %v1062
      %v1065 = vsel %vm1063, %v1062, %v1060
      %v1066 = vlaneseq
      %v1067 = vshrl.u32 %v1066, 7
      %v1068 = vsub.s32 0, %v1067
      %v1069 = vrot.slane %v488, %v1068
      %v1070 = vlaneseq
      %v1071 = vshrl.u32 %v1070, 7
      %v1072 = vsub.s32 0, %v1071
      %v1073 = vrot.slane %v489, %v1072
      %v1074 = vmul.f32 %v1064, %v1069
      %v1075 = vmul.f32 %v1065, %v1073
      %v1076 = vpack.c.bf16 %v1074, %v1074
      %v1077 = vpack.c.bf16 %v1075, %v1075
      %v1079 = vsel %vm548, %v498, 0
      %v1082 = vsel %vm552, %v1076, 0
      %v1085 = vsel %vm552, %v1077, 0
      %1087 = vmatprep.subr.bf16.mxu0 %v1085
      %1088 = vmatpush1.bf16.msra.mxu0 %v1082
      %1089 = vmatprep.subr.bf16.mxu0 0
      %1090 = vmatpush1.bf16.msra.mxu0 0
      %1091 = vmatprep.subr.bf16.mxu0 0
      %1092 = vmatpush1.bf16.msra.mxu0 0
      %1093 = vmatprep.subr.bf16.mxu0 0
      %1094 = vmatpush1.bf16.msra.mxu0 0
      %1095 = vmatprep.subr.bf16.mxu0 0
      %1096 = vmatpush1.bf16.msra.mxu0 0
      %1097 = vmatprep.subr.bf16.mxu0 0
      %1098 = vmatpush1.bf16.msra.mxu0 0
      %1099 = vmatprep.subr.bf16.mxu0 0
      %1100 = vmatpush1.bf16.msra.mxu0 0
      %1101 = vmatprep.subr.bf16.mxu0 0
      %1102 = vmatpush1.bf16.msra.mxu0 0
      %1103 = vmatprep.subr.bf16.mxu0 0
      %1104 = vmatpush1.bf16.msra.mxu0 0
      %1105 = vmatprep.subr.bf16.mxu0 0
      %1106 = vmatpush1.bf16.msra.mxu0 0
      %1107 = vmatprep.subr.bf16.mxu0 0
      %1108 = vmatpush1.bf16.msra.mxu0 0
      %1109 = vmatprep.subr.bf16.mxu0 0
      %1110 = vmatpush1.bf16.msra.mxu0 0
      %1111 = vmatprep.subr.bf16.mxu0 0
      %1112 = vmatpush1.bf16.msra.mxu0 0
      %1113 = vmatprep.subr.bf16.mxu0 0
      %1114 = vmatpush1.bf16.msra.mxu0 0
      %1115 = vmatprep.subr.bf16.mxu0 0
      %1116 = vmatpush1.bf16.msra.mxu0 0
      %1117 = vmatprep.subr.bf16.mxu0 0
      %1118 = vmatpush1.bf16.msra.mxu0 0
      %1119 = vmatprep.mubr.bf16.mxu0 0
      %1120 = vmatmul.mubr.bf16.gmra.mrb[0].mxu0 %v1079
      %v1121 = vpop.f32.mrb[0].mxu0
      %v1122 = vadd.f32 0.0, %v1121
      %v1123 = vpop.f32.mrb[0].mxu0
      %v1124 = vadd.f32 0.0, %v1123
      %v1125 = vpop.f32.mrb[0].mxu0
      %v1126 = vpop.f32.mrb[0].mxu0
      %1127 = vdwg.mxu0
      %v1128 = vadd.f32 %v1057, %v1122
      %v1129 = vadd.f32 %v1058, %v1124
      %v1130 = vld [vmem:[%s5] sm:$0xf]
      %1132 = vset.pattern.permute.xlu0 0
      %1133 = vperm.xlu0 %1132, %v1130
      %v1134 = vpop.permute.xlu0 %1133
      %v1136 = vmul.f32 %v1128, %v1134
      %v1137 = vmul.f32 %v1129, %v1134
      %v1138 = vld [vmem:[%s6] sm:$0xf]
      %1140 = vset.pattern.permute.xlu0 0
      %1141 = vperm.xlu0 %1140, %v1138
      %v1142 = vpop.permute.xlu0 %1141
      %v1144 = vadd.f32 %v1136, %v1142
      %v1145 = vadd.f32 %v1137, %v1142
      %v1146 = vmax.f32 %v1144, 0.0
      %v1147 = vmax.f32 %v1145, 0.0
      %1148 = vrot.lane.b32.xlu0 %v1146, 17
      %v1149 = vpop.permute.xlu0 %1148
      %1150 = vrot.lane.b32.xlu0 %v1147, 17
      %v1151 = vpop.permute.xlu0 %1150
      %v1152 = vsel %vm514, %v1149, %v1151
      %v1153 = vsel %vm514, %v1151, %v1149
      %v1154 = vmul.f32 %v1153, %v520
      %v1155 = vmul.f32 %v1152, %v524
      %v1156 = vpack.c.bf16 %v1154, %v1154
      %v1157 = vpack.c.bf16 %v1155, %v1155
      %1158 = vrot.lane.b32.xlu0 %v1146, 16
      %v1159 = vpop.permute.xlu0 %1158
      %1160 = vrot.lane.b32.xlu0 %v1147, 16
      %v1161 = vpop.permute.xlu0 %1160
      %v1162 = vsel %vm533, %v1159, %v1161
      %v1163 = vsel %vm533, %v1161, %v1159
      %v1164 = vmul.f32 %v1163, %v539
      %v1165 = vmul.f32 %v1162, %v543
      %v1166 = vpack.c.bf16 %v1164, %v1164
      %v1167 = vpack.c.bf16 %v1165, %v1165
      %vm1168 = vcmask 31744
      %v1170 = vsel %vm1168, %v500, 0
      %vm1172 = vcmask 1041408
      %v1174 = vsel %vm1172, %v1166, 0
      %v1177 = vsel %vm1172, %v1167, 0
      %1179 = vmatprep.subr.bf16.mxu0 %v1177
      %1180 = vmatpush1.bf16.msra.mxu0 %v1174
      %1181 = vmatprep.subr.bf16.mxu0 0
      %1182 = vmatpush1.bf16.msra.mxu0 0
      %1183 = vmatprep.subr.bf16.mxu0 0
      %1184 = vmatpush1.bf16.msra.mxu0 0
      %1185 = vmatprep.subr.bf16.mxu0 0
      %1186 = vmatpush1.bf16.msra.mxu0 0
      %1187 = vmatprep.subr.bf16.mxu0 0
      %1188 = vmatpush1.bf16.msra.mxu0 0
      %1189 = vmatprep.subr.bf16.mxu0 0
      %1190 = vmatpush1.bf16.msra.mxu0 0
      %1191 = vmatprep.subr.bf16.mxu0 0
      %1192 = vmatpush1.bf16.msra.mxu0 0
      %1193 = vmatprep.subr.bf16.mxu0 0
      %1194 = vmatpush1.bf16.msra.mxu0 0
      %1195 = vmatprep.subr.bf16.mxu0 0
      %1196 = vmatpush1.bf16.msra.mxu0 0
      %1197 = vmatprep.subr.bf16.mxu0 0
      %1198 = vmatpush1.bf16.msra.mxu0 0
      %1199 = vmatprep.subr.bf16.mxu0 0
      %1200 = vmatpush1.bf16.msra.mxu0 0
      %1201 = vmatprep.subr.bf16.mxu0 0
      %1202 = vmatpush1.bf16.msra.mxu0 0
      %1203 = vmatprep.subr.bf16.mxu0 0
      %1204 = vmatpush1.bf16.msra.mxu0 0
      %1205 = vmatprep.subr.bf16.mxu0 0
      %1206 = vmatpush1.bf16.msra.mxu0 0
      %1207 = vmatprep.subr.bf16.mxu0 0
      %1208 = vmatpush1.bf16.msra.mxu0 0
      %1209 = vmatprep.subr.bf16.mxu0 0
      %1210 = vmatpush1.bf16.msra.mxu0 0
      %1211 = vmatprep.mubr.bf16.mxu0 0
      %1212 = vmatmul.mubr.bf16.gmra.mrb[0].mxu0 %v1170
      %v1213 = vpop.f32.mrb[0].mxu0
      %v1214 = vadd.f32 0.0, %v1213
      %v1215 = vpop.f32.mrb[0].mxu0
      %v1216 = vadd.f32 0.0, %v1215
      %v1217 = vpop.f32.mrb[0].mxu0
      %v1218 = vpop.f32.mrb[0].mxu0
      %1219 = vdwg.mxu0
      %v1221 = vsel %vm1168, %v499, 0
      %v1224 = vsel %vm1172, %v1156, 0
      %v1227 = vsel %vm1172, %v1157, 0
      %1229 = vmatprep.subr.bf16.mxu0 %v1227
      %1230 = vmatpush1.bf16.msra.mxu0 %v1224
      %1231 = vmatprep.subr.bf16.mxu0 0
      %1232 = vmatpush1.bf16.msra.mxu0 0
      %1233 = vmatprep.subr.bf16.mxu0 0
      %1234 = vmatpush1.bf16.msra.mxu0 0
      %1235 = vmatprep.subr.bf16.mxu0 0
      %1236 = vmatpush1.bf16.msra.mxu0 0
      %1237 = vmatprep.subr.bf16.mxu0 0
      %1238 = vmatpush1.bf16.msra.mxu0 0
      %1239 = vmatprep.subr.bf16.mxu0 0
      %1240 = vmatpush1.bf16.msra.mxu0 0
      %1241 = vmatprep.subr.bf16.mxu0 0
      %1242 = vmatpush1.bf16.msra.mxu0 0
      %1243 = vmatprep.subr.bf16.mxu0 0
      %1244 = vmatpush1.bf16.msra.mxu0 0
      %1245 = vmatprep.subr.bf16.mxu0 0
      %1246 = vmatpush1.bf16.msra.mxu0 0
      %1247 = vmatprep.subr.bf16.mxu0 0
      %1248 = vmatpush1.bf16.msra.mxu0 0
      %1249 = vmatprep.subr.bf16.mxu0 0
      %1250 = vmatpush1.bf16.msra.mxu0 0
      %1251 = vmatprep.subr.bf16.mxu0 0
      %1252 = vmatpush1.bf16.msra.mxu0 0
      %1253 = vmatprep.subr.bf16.mxu0 0
      %1254 = vmatpush1.bf16.msra.mxu0 0
      %1255 = vmatprep.subr.bf16.mxu0 0
      %1256 = vmatpush1.bf16.msra.mxu0 0
      %1257 = vmatprep.subr.bf16.mxu0 0
      %1258 = vmatpush1.bf16.msra.mxu0 0
      %1259 = vmatprep.subr.bf16.mxu0 0
      %1260 = vmatpush1.bf16.msra.mxu0 0
      %1261 = vmatprep.mubr.bf16.mxu0 0
      %1262 = vmatmul.mubr.bf16.gmra.mrb[0].mxu0 %v1221
      %v1263 = vpop.f32.mrb[0].mxu0
      %v1264 = vadd.f32 %v1214, %v1263
      %v1265 = vpop.f32.mrb[0].mxu0
      %v1266 = vadd.f32 %v1216, %v1265
      %v1267 = vpop.f32.mrb[0].mxu0
      %v1268 = vpop.f32.mrb[0].mxu0
      %1269 = vdwg.mxu0
      %1270 = vrot.lane.b32.xlu0 %v1146, 15
      %v1271 = vpop.permute.xlu0 %1270
      %1272 = vrot.lane.b32.xlu0 %v1147, 15
      %v1273 = vpop.permute.xlu0 %1272
      %v1274 = vsel %vm654, %v1271, %v1273
      %v1275 = vsel %vm654, %v1273, %v1271
      %v1276 = vmul.f32 %v1275, %v660
      %v1277 = vmul.f32 %v1274, %v664
      %v1278 = vpack.c.bf16 %v1276, %v1276
      %v1279 = vpack.c.bf16 %v1277, %v1277
      %v1281 = vsel %vm1168, %v501, 0
      %v1284 = vsel %vm1172, %v1278, 0
      %v1287 = vsel %vm1172, %v1279, 0
      %1289 = vmatprep.subr.bf16.mxu0 %v1287
      %1290 = vmatpush1.bf16.msra.mxu0 %v1284
      %1291 = vmatprep.subr.bf16.mxu0 0
      %1292 = vmatpush1.bf16.msra.mxu0 0
      %1293 = vmatprep.subr.bf16.mxu0 0
      %1294 = vmatpush1.bf16.msra.mxu0 0
      %1295 = vmatprep.subr.bf16.mxu0 0
      %1296 = vmatpush1.bf16.msra.mxu0 0
      %1297 = vmatprep.subr.bf16.mxu0 0
      %1298 = vmatpush1.bf16.msra.mxu0 0
      %1299 = vmatprep.subr.bf16.mxu0 0
      %1300 = vmatpush1.bf16.msra.mxu0 0
      %1301 = vmatprep.subr.bf16.mxu0 0
      %1302 = vmatpush1.bf16.msra.mxu0 0
      %1303 = vmatprep.subr.bf16.mxu0 0
      %1304 = vmatpush1.bf16.msra.mxu0 0
      %1305 = vmatprep.subr.bf16.mxu0 0
      %1306 = vmatpush1.bf16.msra.mxu0 0
      %1307 = vmatprep.subr.bf16.mxu0 0
      %1308 = vmatpush1.bf16.msra.mxu0 0
      %1309 = vmatprep.subr.bf16.mxu0 0
      %1310 = vmatpush1.bf16.msra.mxu0 0
      %1311 = vmatprep.subr.bf16.mxu0 0
      %1312 = vmatpush1.bf16.msra.mxu0 0
      %1313 = vmatprep.subr.bf16.mxu0 0
      %1314 = vmatpush1.bf16.msra.mxu0 0
      %1315 = vmatprep.subr.bf16.mxu0 0
      %1316 = vmatpush1.bf16.msra.mxu0 0
      %1317 = vmatprep.subr.bf16.mxu0 0
      %1318 = vmatpush1.bf16.msra.mxu0 0
      %1319 = vmatprep.subr.bf16.mxu0 0
      %1320 = vmatpush1.bf16.msra.mxu0 0
      %1321 = vmatprep.mubr.bf16.mxu0 0
      %1322 = vmatmul.mubr.bf16.gmra.mrb[0].mxu0 %v1281
      %v1323 = vpop.f32.mrb[0].mxu0
      %v1324 = vadd.f32 0.0, %v1323
      %v1325 = vpop.f32.mrb[0].mxu0
      %v1326 = vadd.f32 0.0, %v1325
      %v1327 = vpop.f32.mrb[0].mxu0
      %v1328 = vpop.f32.mrb[0].mxu0
      %1329 = vdwg.mxu0
      %v1330 = vadd.f32 %v1264, %v1324
      %v1331 = vadd.f32 %v1266, %v1326
      %1332 = vrot.lane.b32.xlu0 %v1146, 1
      %v1333 = vpop.permute.xlu0 %1332
      %1334 = vrot.lane.b32.xlu0 %v1147, 1
      %v1335 = vpop.permute.xlu0 %1334
      %v1336 = vsel %vm725, %v1333, %v1335
      %v1337 = vsel %vm725, %v1335, %v1333
      %v1338 = vmul.f32 %v1337, %v731
      %v1339 = vmul.f32 %v1336, %v735
      %v1340 = vpack.c.bf16 %v1338, %v1338
      %v1341 = vpack.c.bf16 %v1339, %v1339
      %v1343 = vsel %vm1168, %v502, 0
      %v1346 = vsel %vm1172, %v1340, 0
      %v1349 = vsel %vm1172, %v1341, 0
      %1351 = vmatprep.subr.bf16.mxu0 %v1349
      %1352 = vmatpush1.bf16.msra.mxu0 %v1346
      %1353 = vmatprep.subr.bf16.mxu0 0
      %1354 = vmatpush1.bf16.msra.mxu0 0
      %1355 = vmatprep.subr.bf16.mxu0 0
      %1356 = vmatpush1.bf16.msra.mxu0 0
      %1357 = vmatprep.subr.bf16.mxu0 0
      %1358 = vmatpush1.bf16.msra.mxu0 0
      %1359 = vmatprep.subr.bf16.mxu0 0
      %1360 = vmatpush1.bf16.msra.mxu0 0
      %1361 = vmatprep.subr.bf16.mxu0 0
      %1362 = vmatpush1.bf16.msra.mxu0 0
      %1363 = vmatprep.subr.bf16.mxu0 0
      %1364 = vmatpush1.bf16.msra.mxu0 0
      %1365 = vmatprep.subr.bf16.mxu0 0
      %1366 = vmatpush1.bf16.msra.mxu0 0
      %1367 = vmatprep.subr.bf16.mxu0 0
      %1368 = vmatpush1.bf16.msra.mxu0 0
      %1369 = vmatprep.subr.bf16.mxu0 0
      %1370 = vmatpush1.bf16.msra.mxu0 0
      %1371 = vmatprep.subr.bf16.mxu0 0
      %1372 = vmatpush1.bf16.msra.mxu0 0
      %1373 = vmatprep.subr.bf16.mxu0 0
      %1374 = vmatpush1.bf16.msra.mxu0 0
      %1375 = vmatprep.subr.bf16.mxu0 0
      %1376 = vmatpush1.bf16.msra.mxu0 0
      %1377 = vmatprep.subr.bf16.mxu0 0
      %1378 = vmatpush1.bf16.msra.mxu0 0
      %1379 = vmatprep.subr.bf16.mxu0 0
      %1380 = vmatpush1.bf16.msra.mxu0 0
      %1381 = vmatprep.subr.bf16.mxu0 0
      %1382 = vmatpush1.bf16.msra.mxu0 0
      %1383 = vmatprep.mubr.bf16.mxu0 0
      %1384 = vmatmul.mubr.bf16.gmra.mrb[0].mxu0 %v1343
      %v1385 = vpop.f32.mrb[0].mxu0
      %v1386 = vadd.f32 0.0, %v1385
      %v1387 = vpop.f32.mrb[0].mxu0
      %v1388 = vadd.f32 0.0, %v1387
      %v1389 = vpop.f32.mrb[0].mxu0
      %v1390 = vpop.f32.mrb[0].mxu0
      %1391 = vdwg.mxu0
      %v1392 = vadd.f32 %v1330, %v1386
      %v1393 = vadd.f32 %v1331, %v1388
      %v1394 = vpack.c.bf16 %v1146, %v1146
      %v1395 = vpack.c.bf16 %v1147, %v1147
      %v1397 = vsel %vm1168, %v503, 0
      %v1400 = vsel %vm1172, %v1394, 0
      %v1403 = vsel %vm1172, %v1395, 0
      %1405 = vmatprep.subr.bf16.mxu0 %v1403
      %1406 = vmatpush1.bf16.msra.mxu0 %v1400
      %1407 = vmatprep.subr.bf16.mxu0 0
      %1408 = vmatpush1.bf16.msra.mxu0 0
      %1409 = vmatprep.subr.bf16.mxu0 0
      %1410 = vmatpush1.bf16.msra.mxu0 0
      %1411 = vmatprep.subr.bf16.mxu0 0
      %1412 = vmatpush1.bf16.msra.mxu0 0
      %1413 = vmatprep.subr.bf16.mxu0 0
      %1414 = vmatpush1.bf16.msra.mxu0 0
      %1415 = vmatprep.subr.bf16.mxu0 0
      %1416 = vmatpush1.bf16.msra.mxu0 0
      %1417 = vmatprep.subr.bf16.mxu0 0
      %1418 = vmatpush1.bf16.msra.mxu0 0
      %1419 = vmatprep.subr.bf16.mxu0 0
      %1420 = vmatpush1.bf16.msra.mxu0 0
      %1421 = vmatprep.subr.bf16.mxu0 0
      %1422 = vmatpush1.bf16.msra.mxu0 0
      %1423 = vmatprep.subr.bf16.mxu0 0
      %1424 = vmatpush1.bf16.msra.mxu0 0
      %1425 = vmatprep.subr.bf16.mxu0 0
      %1426 = vmatpush1.bf16.msra.mxu0 0
      %1427 = vmatprep.subr.bf16.mxu0 0
      %1428 = vmatpush1.bf16.msra.mxu0 0
      %1429 = vmatprep.subr.bf16.mxu0 0
      %1430 = vmatpush1.bf16.msra.mxu0 0
      %1431 = vmatprep.subr.bf16.mxu0 0
      %1432 = vmatpush1.bf16.msra.mxu0 0
      %1433 = vmatprep.subr.bf16.mxu0 0
      %1434 = vmatpush1.bf16.msra.mxu0 0
      %1435 = vmatprep.subr.bf16.mxu0 0
      %1436 = vmatpush1.bf16.msra.mxu0 0
      %1437 = vmatprep.mubr.bf16.mxu0 0
      %1438 = vmatmul.mubr.bf16.gmra.mrb[0].mxu0 %v1397
      %v1439 = vpop.f32.mrb[0].mxu0
      %v1440 = vadd.f32 0.0, %v1439
      %v1441 = vpop.f32.mrb[0].mxu0
      %v1442 = vadd.f32 0.0, %v1441
      %v1443 = vpop.f32.mrb[0].mxu0
      %v1444 = vpop.f32.mrb[0].mxu0
      %1445 = vdwg.mxu0
      %v1446 = vadd.f32 %v1392, %v1440
      %v1447 = vadd.f32 %v1393, %v1442
      %1448 = vrot.lane.b32.xlu0 %v1146, 127
      %v1449 = vpop.permute.xlu0 %1448
      %1450 = vrot.lane.b32.xlu0 %v1147, 127
      %v1451 = vpop.permute.xlu0 %1450
      %v1452 = vsel %vm850, %v1449, %v1451
      %v1453 = vsel %vm850, %v1451, %v1449
      %v1454 = vmul.f32 %v1452, %v856
      %v1455 = vmul.f32 %v1453, %v860
      %v1456 = vpack.c.bf16 %v1454, %v1454
      %v1457 = vpack.c.bf16 %v1455, %v1455
      %v1459 = vsel %vm1168, %v504, 0
      %v1462 = vsel %vm1172, %v1456, 0
      %v1465 = vsel %vm1172, %v1457, 0
      %1467 = vmatprep.subr.bf16.mxu0 %v1465
      %1468 = vmatpush1.bf16.msra.mxu0 %v1462
      %1469 = vmatprep.subr.bf16.mxu0 0
      %1470 = vmatpush1.bf16.msra.mxu0 0
      %1471 = vmatprep.subr.bf16.mxu0 0
      %1472 = vmatpush1.bf16.msra.mxu0 0
      %1473 = vmatprep.subr.bf16.mxu0 0
      %1474 = vmatpush1.bf16.msra.mxu0 0
      %1475 = vmatprep.subr.bf16.mxu0 0
      %1476 = vmatpush1.bf16.msra.mxu0 0
      %1477 = vmatprep.subr.bf16.mxu0 0
      %1478 = vmatpush1.bf16.msra.mxu0 0
      %1479 = vmatprep.subr.bf16.mxu0 0
      %1480 = vmatpush1.bf16.msra.mxu0 0
      %1481 = vmatprep.subr.bf16.mxu0 0
      %1482 = vmatpush1.bf16.msra.mxu0 0
      %1483 = vmatprep.subr.bf16.mxu0 0
      %1484 = vmatpush1.bf16.msra.mxu0 0
      %1485 = vmatprep.subr.bf16.mxu0 0
      %1486 = vmatpush1.bf16.msra.mxu0 0
      %1487 = vmatprep.subr.bf16.mxu0 0
      %1488 = vmatpush1.bf16.msra.mxu0 0
      %1489 = vmatprep.subr.bf16.mxu0 0
      %1490 = vmatpush1.bf16.msra.mxu0 0
      %1491 = vmatprep.subr.bf16.mxu0 0
      %1492 = vmatpush1.bf16.msra.mxu0 0
      %1493 = vmatprep.subr.bf16.mxu0 0
      %1494 = vmatpush1.bf16.msra.mxu0 0
      %1495 = vmatprep.subr.bf16.mxu0 0
      %1496 = vmatpush1.bf16.msra.mxu0 0
      %1497 = vmatprep.subr.bf16.mxu0 0
      %1498 = vmatpush1.bf16.msra.mxu0 0
      %1499 = vmatprep.mubr.bf16.mxu0 0
      %1500 = vmatmul.mubr.bf16.gmra.mrb[0].mxu0 %v1459
      %v1501 = vpop.f32.mrb[0].mxu0
      %v1502 = vadd.f32 0.0, %v1501
      %v1503 = vpop.f32.mrb[0].mxu0
      %v1504 = vadd.f32 0.0, %v1503
      %v1505 = vpop.f32.mrb[0].mxu0
      %v1506 = vpop.f32.mrb[0].mxu0
      %1507 = vdwg.mxu0
      %v1508 = vadd.f32 %v1446, %v1502
      %v1509 = vadd.f32 %v1447, %v1504
      %1510 = vrot.lane.b32.xlu0 %v1146, 113
      %v1511 = vpop.permute.xlu0 %1510
      %1512 = vrot.lane.b32.xlu0 %v1147, 113
      %v1513 = vpop.permute.xlu0 %1512
      %v1514 = vsel %vm921, %v1511, %v1513
      %v1515 = vsel %vm921, %v1513, %v1511
      %v1516 = vmul.f32 %v1514, %v927
      %v1517 = vmul.f32 %v1515, %v931
      %v1518 = vpack.c.bf16 %v1516, %v1516
      %v1519 = vpack.c.bf16 %v1517, %v1517
      %v1521 = vsel %vm1168, %v505, 0
      %v1524 = vsel %vm1172, %v1518, 0
      %v1527 = vsel %vm1172, %v1519, 0
      %1529 = vmatprep.subr.bf16.mxu0 %v1527
      %1530 = vmatpush1.bf16.msra.mxu0 %v1524
      %1531 = vmatprep.subr.bf16.mxu0 0
      %1532 = vmatpush1.bf16.msra.mxu0 0
      %1533 = vmatprep.subr.bf16.mxu0 0
      %1534 = vmatpush1.bf16.msra.mxu0 0
      %1535 = vmatprep.subr.bf16.mxu0 0
      %1536 = vmatpush1.bf16.msra.mxu0 0
      %1537 = vmatprep.subr.bf16.mxu0 0
      %1538 = vmatpush1.bf16.msra.mxu0 0
      %1539 = vmatprep.subr.bf16.mxu0 0
      %1540 = vmatpush1.bf16.msra.mxu0 0
      %1541 = vmatprep.subr.bf16.mxu0 0
      %1542 = vmatpush1.bf16.msra.mxu0 0
      %1543 = vmatprep.subr.bf16.mxu0 0
      %1544 = vmatpush1.bf16.msra.mxu0 0
      %1545 = vmatprep.subr.bf16.mxu0 0
      %1546 = vmatpush1.bf16.msra.mxu0 0
      %1547 = vmatprep.subr.bf16.mxu0 0
      %1548 = vmatpush1.bf16.msra.mxu0 0
      %1549 = vmatprep.subr.bf16.mxu0 0
      %1550 = vmatpush1.bf16.msra.mxu0 0
      %1551 = vmatprep.subr.bf16.mxu0 0
      %1552 = vmatpush1.bf16.msra.mxu0 0
      %1553 = vmatprep.subr.bf16.mxu0 0
      %1554 = vmatpush1.bf16.msra.mxu0 0
      %1555 = vmatprep.subr.bf16.mxu0 0
      %1556 = vmatpush1.bf16.msra.mxu0 0
      %1557 = vmatprep.subr.bf16.mxu0 0
      %1558 = vmatpush1.bf16.msra.mxu0 0
      %1559 = vmatprep.subr.bf16.mxu0 0
      %1560 = vmatpush1.bf16.msra.mxu0 0
      %1561 = vmatprep.mubr.bf16.mxu0 0
      %1562 = vmatmul.mubr.bf16.gmra.mrb[0].mxu0 %v1521
      %v1563 = vpop.f32.mrb[0].mxu0
      %v1564 = vadd.f32 0.0, %v1563
      %v1565 = vpop.f32.mrb[0].mxu0
      %v1566 = vadd.f32 0.0, %v1565
      %v1567 = vpop.f32.mrb[0].mxu0
      %v1568 = vpop.f32.mrb[0].mxu0
      %1569 = vdwg.mxu0
      %v1570 = vadd.f32 %v1508, %v1564
      %v1571 = vadd.f32 %v1509, %v1566
      %1572 = vrot.lane.b32.xlu0 %v1146, 112
      %v1573 = vpop.permute.xlu0 %1572
      %1574 = vrot.lane.b32.xlu0 %v1147, 112
      %v1575 = vpop.permute.xlu0 %1574
      %v1576 = vsel %vm992, %v1573, %v1575
      %v1577 = vsel %vm992, %v1575, %v1573
      %v1578 = vmul.f32 %v1576, %v998
      %v1579 = vmul.f32 %v1577, %v1002
      %v1580 = vpack.c.bf16 %v1578, %v1578
      %v1581 = vpack.c.bf16 %v1579, %v1579
      %v1583 = vsel %vm1168, %v506, 0
      %v1586 = vsel %vm1172, %v1580, 0
      %v1589 = vsel %vm1172, %v1581, 0
      %1591 = vmatprep.subr.bf16.mxu0 %v1589
      %1592 = vmatpush1.bf16.msra.mxu0 %v1586
      %1593 = vmatprep.subr.bf16.mxu0 0
      %1594 = vmatpush1.bf16.msra.mxu0 0
      %1595 = vmatprep.subr.bf16.mxu0 0
      %1596 = vmatpush1.bf16.msra.mxu0 0
      %1597 = vmatprep.subr.bf16.mxu0 0
      %1598 = vmatpush1.bf16.msra.mxu0 0
      %1599 = vmatprep.subr.bf16.mxu0 0
      %1600 = vmatpush1.bf16.msra.mxu0 0
      %1601 = vmatprep.subr.bf16.mxu0 0
      %1602 = vmatpush1.bf16.msra.mxu0 0
      %1603 = vmatprep.subr.bf16.mxu0 0
      %1604 = vmatpush1.bf16.msra.mxu0 0
      %1605 = vmatprep.subr.bf16.mxu0 0
      %1606 = vmatpush1.bf16.msra.mxu0 0
      %1607 = vmatprep.subr.bf16.mxu0 0
      %1608 = vmatpush1.bf16.msra.mxu0 0
      %1609 = vmatprep.subr.bf16.mxu0 0
      %1610 = vmatpush1.bf16.msra.mxu0 0
      %1611 = vmatprep.subr.bf16.mxu0 0
      %1612 = vmatpush1.bf16.msra.mxu0 0
      %1613 = vmatprep.subr.bf16.mxu0 0
      %1614 = vmatpush1.bf16.msra.mxu0 0
      %1615 = vmatprep.subr.bf16.mxu0 0
      %1616 = vmatpush1.bf16.msra.mxu0 0
      %1617 = vmatprep.subr.bf16.mxu0 0
      %1618 = vmatpush1.bf16.msra.mxu0 0
      %1619 = vmatprep.subr.bf16.mxu0 0
      %1620 = vmatpush1.bf16.msra.mxu0 0
      %1621 = vmatprep.subr.bf16.mxu0 0
      %1622 = vmatpush1.bf16.msra.mxu0 0
      %1623 = vmatprep.mubr.bf16.mxu0 0
      %1624 = vmatmul.mubr.bf16.gmra.mrb[0].mxu0 %v1583
      %v1625 = vpop.f32.mrb[0].mxu0
      %v1626 = vadd.f32 0.0, %v1625
      %v1627 = vpop.f32.mrb[0].mxu0
      %v1628 = vadd.f32 0.0, %v1627
      %v1629 = vpop.f32.mrb[0].mxu0
      %v1630 = vpop.f32.mrb[0].mxu0
      %1631 = vdwg.mxu0
      %v1632 = vadd.f32 %v1570, %v1626
      %v1633 = vadd.f32 %v1571, %v1628
      %1634 = vrot.lane.b32.xlu0 %v1146, 111
      %v1635 = vpop.permute.xlu0 %1634
      %1636 = vrot.lane.b32.xlu0 %v1147, 111
      %v1637 = vpop.permute.xlu0 %1636
      %v1638 = vsel %vm1063, %v1635, %v1637
      %v1639 = vsel %vm1063, %v1637, %v1635
      %v1640 = vmul.f32 %v1638, %v1069
      %v1641 = vmul.f32 %v1639, %v1073
      %v1642 = vpack.c.bf16 %v1640, %v1640
      %v1643 = vpack.c.bf16 %v1641, %v1641
      %v1645 = vsel %vm1168, %v507, 0
      %v1648 = vsel %vm1172, %v1642, 0
      %v1651 = vsel %vm1172, %v1643, 0
      %1653 = vmatprep.subr.bf16.mxu0 %v1651
      %1654 = vmatpush1.bf16.msra.mxu0 %v1648
      %1655 = vmatprep.subr.bf16.mxu0 0
      %1656 = vmatpush1.bf16.msra.mxu0 0
      %1657 = vmatprep.subr.bf16.mxu0 0
      %1658 = vmatpush1.bf16.msra.mxu0 0
      %1659 = vmatprep.subr.bf16.mxu0 0
      %1660 = vmatpush1.bf16.msra.mxu0 0
      %1661 = vmatprep.subr.bf16.mxu0 0
      %1662 = vmatpush1.bf16.msra.mxu0 0
      %1663 = vmatprep.subr.bf16.mxu0 0
      %1664 = vmatpush1.bf16.msra.mxu0 0
      %1665 = vmatprep.subr.bf16.mxu0 0
      %1666 = vmatpush1.bf16.msra.mxu0 0
      %1667 = vmatprep.subr.bf16.mxu0 0
      %1668 = vmatpush1.bf16.msra.mxu0 0
      %1669 = vmatprep.subr.bf16.mxu0 0
      %1670 = vmatpush1.bf16.msra.mxu0 0
      %1671 = vmatprep.subr.bf16.mxu0 0
      %1672 = vmatpush1.bf16.msra.mxu0 0
      %1673 = vmatprep.subr.bf16.mxu0 0
      %1674 = vmatpush1.bf16.msra.mxu0 0
      %1675 = vmatprep.subr.bf16.mxu0 0
      %1676 = vmatpush1.bf16.msra.mxu0 0
      %1677 = vmatprep.subr.bf16.mxu0 0
      %1678 = vmatpush1.bf16.msra.mxu0 0
      %1679 = vmatprep.subr.bf16.mxu0 0
      %1680 = vmatpush1.bf16.msra.mxu0 0
      %1681 = vmatprep.subr.bf16.mxu0 0
      %1682 = vmatpush1.bf16.msra.mxu0 0
      %1683 = vmatprep.subr.bf16.mxu0 0
      %1684 = vmatpush1.bf16.msra.mxu0 0
      %1685 = vmatprep.mubr.bf16.mxu0 0
      %1686 = vmatmul.mubr.bf16.gmra.mrb[0].mxu0 %v1645
      %v1687 = vpop.f32.mrb[0].mxu0
      %v1688 = vadd.f32 0.0, %v1687
      %v1689 = vpop.f32.mrb[0].mxu0
      %v1690 = vadd.f32 0.0, %v1689
      %v1691 = vpop.f32.mrb[0].mxu0
      %v1692 = vpop.f32.mrb[0].mxu0
      %1693 = vdwg.mxu0
      %v1694 = vadd.f32 %v1632, %v1688
      %v1695 = vadd.f32 %v1633, %v1690
      %v1696 = vld [vmem:[%s8] sm:$0xf]
      %1698 = vset.pattern.permute.xlu0 0
      %1699 = vperm.xlu0 %1698, %v1696
      %v1700 = vpop.permute.xlu0 %1699
      %v1702 = vmul.f32 %v1694, %v1700
      %v1703 = vmul.f32 %v1695, %v1700
      %v1704 = vld [vmem:[%s9] sm:$0xf]
      %1706 = vset.pattern.permute.xlu0 0
      %1707 = vperm.xlu0 %1706, %v1704
      %v1708 = vpop.permute.xlu0 %1707
      %v1710 = vadd.f32 %v1702, %v1708
      %v1711 = vadd.f32 %v1703, %v1708
      %v1712 = vmax.f32 %v1710, 0.0
      %v1713 = vmax.f32 %v1711, 0.0
      %v1716 = vcombine.low %v1712, %v1713
      %1718 = vst [vmem:[%s376] sm:$0xff] %v1716
      %p1719 = scmp.lt.s32.totalorder %s21, 1
      %s1720 = scalar_select %p1719, %s21, 1
      %s1721 = smul.addr %s1720, 2
      %s1722 = smul.addr %s1721, 4
      %s1723 = scalar_lea.vmem %s10, %s1722
      // Predicated region
      $region61: #{up_forward.1} parent=59 // pred_check
        %p1724 = pneg %p259
      $region62: #{up_forward.1} parent=59 // pred_check_branch
        %1726 = sbr.rel (%p1724) target = $region64
      $region63: #{up_forward.1} parent=59 // pred_region
        _
      $region64: #{up_forward.1} parent=59 // pred_fallthru
        _
    $region60: #{up_forward.1} parent=5 // pred_fallthru
      _
    %p1727 = scmp.le.s32.totalorder 2, %s16
    // Predicated region
    $region65: #{up_forward.1} parent=5 // pred_check
      %p1728 = pneg %p1727
    $region66: #{up_forward.1} parent=5 // pred_check_branch
      %1730 = sbr.rel (%p1728) target = $region68
    $region67: #{up_forward.1} parent=5 // pred_region
      %s1731 = ssub.s32 %s16, 2
      // Predicated region
      $region69: #{up_forward.1} parent=67 // pred_check
        %p1732 = pneg %p265
      $region70: #{up_forward.1} parent=67 // pred_check_branch
        %1734 = sbr.rel (%p1732) target = $region72
      $region71: #{up_forward.1} parent=67 // pred_region
        %p1735 = scmp.lt.s32.totalorder %s22, 1
        %s1736 = scalar_select %p1735, %s22, 1
        %s1737 = smul.addr %s1736, 2
        %s1738 = smul.addr %s1737, 4
        %s1739 = scalar_lea.vmem %s10, %s1738
      $region72: #{up_forward.1} parent=67 // pred_fallthru
        _
    $region68: #{up_forward.1} parent=5 // pred_fallthru
      _
  $region6: #{up_forward.1} parent=0 // loop_footer
    %s20 = sadd.s32 1, %s16
  $region7: #{up_forward.1} parent=0 // loop_footer_branch
    %15 = sbr.rel target = $region3
  $region8: #{up_forward.1} parent=0 // loop_exit
    _

</llo_original>
